<compile_context>
chip_gen: v5e
topology: v5e:2x2
jax: 0.10.0
libtpu: 0.0.40
codegen_flags: <defaults>
</compile_context>

<pallas_src>
import jax
import jax.numpy as jnp
from jax import lax
from jax.experimental import pallas as pl
from jax.experimental.pallas import tpu as pltpu

D_MODEL = 32
N_HEADS = 4
D_HEAD = D_MODEL // N_HEADS
D_FF = 64
EPS = 1e-6
NEG_INF = -1e9
BIG = 1e9

# ---- packed-parameter layout -------------------------------------------------
# Weight slab W: (D_MODEL, 8*D_MODEL + D_FF) = (32, 320), bf16
#   [0:96)    self-attn  Wq|Wk|Wv  (Wq pre-scaled by 1/sqrt(d_head))
#   [96:128)  self-attn  Wo
#   [128:224) cross-attn Wq|Wk|Wv  (Wq pre-scaled)
#   [224:256) cross-attn Wo
#   [256:320) ff_w1 (32, 64)
# ff_w2 kept as its own (64, 32) bf16 slab (different row count).
# Vector slab V: (16, 64) f32 — one per-channel vector per row (padded to 64).
_C_SA, _C_CA, _C_FF1 = 0, 4 * D_MODEL, 8 * D_MODEL
_R_SA_BQ, _R_SA_BK, _R_SA_BV, _R_SA_BO = 0, 1, 2, 3
_R_CA_BQ, _R_CA_BK, _R_CA_BV, _R_CA_BO = 4, 5, 6, 7
_R_FF_B1, _R_FF_B2 = 8, 9
_R_LN0_G, _R_LN0_B = 10, 11
_R_LN1_G, _R_LN1_B = 12, 13
_R_LN2_G, _R_LN2_B = 14, 15
_VEC_ROWS, _VEC_COLS = 16, 64


def _layer_norm(x, gamma, beta):
    # Annotated-Transformer LayerNorm: unbiased std, eps added to std.  (f32)
    mean = jnp.mean(x, axis=-1, keepdims=True)
    var = jnp.sum((x - mean) ** 2, axis=-1, keepdims=True) / (x.shape[-1] - 1)
    return gamma * (x - mean) / (jnp.sqrt(var) + EPS) + beta


# ---------------------------------------------------------------------------
# Pallas kernel: one grid step per batch element ("parallel" axis).
# Refs (batch dim squeezed):
#   x_ref (T, D) bf16, mem_ref (S, D) bf16, tgt_mask_ref (T, T) f32,
#   src_mask_ref (T, S) f32, w_ref (32, 320) bf16, w2_ref (64, 32) bf16,
#   vec_ref (16, 64) f32, o_ref (T, D) f32.
# ---------------------------------------------------------------------------
def decode_layer_kernel(x_ref, mem_ref, tgt_mask_ref, src_mask_ref,
                        w_ref, w2_ref, vec_ref, o_ref):
    x = x_ref[...].astype(jnp.float32)        # residual stream in f32
    mem_bf = mem_ref[...]                     # bf16 MXU operand
    W = w_ref[...]                            # (32, 320) bf16
    W2 = w2_ref[...]                          # (64, 32)  bf16
    V = vec_ref[...]                          # (16, 64)  f32

    # Additive mask bias, computed once per sublayer (mask==1 -> 0, 0 -> -1e9).
    tgt_bias = (tgt_mask_ref[...] - 1.0) * BIG
    src_bias = (src_mask_ref[...] - 1.0) * BIG

    def vec_row(r, n=D_MODEL):
        return V[r:r + 1, :n]                 # (1, n), broadcasts over rows

    def attention(q, k, v, bias):
        # q (Tq, D), k/v (Tk, D), bias (Tq, Tk); all f32. 1/sqrt(d_head)
        # already folded into q via the packed Wq/bq.
        heads = []
        for h in range(N_HEADS):              # static unroll, lane slices
            lo = h * D_HEAD
            q_h = q[:, lo:lo + D_HEAD]
            k_h = k[:, lo:lo + D_HEAD]
            v_h = v[:, lo:lo + D_HEAD]
            s = lax.dot_general(q_h, k_h, (((1,), (1,)), ((), ())),
                                preferred_element_type=jnp.float32)
            s = s + bias
            s = s - jnp.max(s, axis=-1, keepdims=True)
            p = jnp.exp(s)
            denom = jnp.sum(p, axis=-1, keepdims=True)
            o_h = jnp.dot(p, v_h, preferred_element_type=jnp.float32)
            # Deferred softmax normalization on the EUP (approx reciprocal).
            heads.append(o_h * pl.reciprocal(denom, approx=True))
        return jnp.concatenate(heads, axis=-1)          # (Tq, D) f32

    # TODO(synk): dropout inside SublayerConnection is identity (eval mode).

    # ---- Sublayer 0: masked self-attention (fused Q|K|V projection) --------
    y = _layer_norm(x, vec_row(_R_LN0_G), vec_row(_R_LN0_B))
    y_bf = y.astype(jnp.bfloat16)
    qkv = jnp.dot(y_bf, W[:, _C_SA:_C_SA + 3 * D_MODEL],
                  preferred_element_type=jnp.float32)            # (T, 96)
    q = qkv[:, 0 * D_MODEL:1 * D_MODEL] + vec_row(_R_SA_BQ)      # pre-scaled
    k = qkv[:, 1 * D_MODEL:2 * D_MODEL] + vec_row(_R_SA_BK)
    v = qkv[:, 2 * D_MODEL:3 * D_MODEL] + vec_row(_R_SA_BV)
    o_cat = attention(q, k, v, tgt_bias)
    x = x + (jnp.dot(o_cat.astype(jnp.bfloat16),
                     W[:, _C_SA + 3 * D_MODEL:_C_SA + 4 * D_MODEL],
                     preferred_element_type=jnp.float32) + vec_row(_R_SA_BO))

    # ---- Sublayer 1: cross-attention (Q alone, fused K|V from memory) ------
    y = _layer_norm(x, vec_row(_R_LN1_G), vec_row(_R_LN1_B))
    q = jnp.dot(y.astype(jnp.bfloat16), W[:, _C_CA:_C_CA + D_MODEL],
                preferred_element_type=jnp.float32) + vec_row(_R_CA_BQ)
    kv = jnp.dot(mem_bf, W[:, _C_CA + D_MODEL:_C_CA + 3 * D_MODEL],
                 preferred_element_type=jnp.float32)             # (S, 64)
    k = kv[:, 0:D_MODEL] + vec_row(_R_CA_BK)
    v = kv[:, D_MODEL:2 * D_MODEL] + vec_row(_R_CA_BV)
    o_cat = attention(q, k, v, src_bias)
    x = x + (jnp.dot(o_cat.astype(jnp.bfloat16),
                     W[:, _C_CA + 3 * D_MODEL:_C_CA + 4 * D_MODEL],
                     preferred_element_type=jnp.float32) + vec_row(_R_CA_BO))

    # ---- Sublayer 2: position-wise feed-forward ----------------------------
    y = _layer_norm(x, vec_row(_R_LN2_G), vec_row(_R_LN2_B))
    h1 = jnp.maximum(
        jnp.dot(y.astype(jnp.bfloat16), W[:, _C_FF1:_C_FF1 + D_FF],
                preferred_element_type=jnp.float32) + vec_row(_R_FF_B1, D_FF),
        0.0)
    x = x + (jnp.dot(h1.astype(jnp.bfloat16), W2,
                     preferred_element_type=jnp.float32) + vec_row(_R_FF_B2))

    o_ref[...] = x.astype(o_ref.dtype)


# ---------------------------------------------------------------------------
# Parameter packing (done ONCE, outside the per-call path).
# ---------------------------------------------------------------------------
def pack_params(params):
    (sa_wq, sa_bq, sa_wk, sa_bk, sa_wv, sa_bv, sa_wo, sa_bo,
     ca_wq, ca_bq, ca_wk, ca_bk, ca_wv, ca_bv, ca_wo, ca_bo,
     ff_w1, ff_b1, ff_w2, ff_b2,
     ln0_g, ln0_b, ln1_g, ln1_b, ln2_g, ln2_b) = params

    scale = 1.0 / jnp.sqrt(jnp.float32(D_HEAD))

    def fuse_qkv(w):   # (H, D, dh) -> (D, H*dh)
        return jnp.transpose(w, (1, 0, 2)).reshape(D_MODEL, N_HEADS * D_HEAD)

    def fuse_o(w):     # (H, dh, D) -> (H*dh, D)
        return w.reshape(N_HEADS * D_HEAD, D_MODEL)

    # 1/sqrt(d_head) folded into Wq (and bq) at pack time.
    w_slab = jnp.concatenate(
        [fuse_qkv(sa_wq) * scale, fuse_qkv(sa_wk), fuse_qkv(sa_wv), fuse_o(sa_wo),
         fuse_qkv(ca_wq) * scale, fuse_qkv(ca_wk), fuse_qkv(ca_wv), fuse_o(ca_wo),
         ff_w1], axis=1).astype(jnp.bfloat16)            # (32, 320) bf16

    def row(v):
        v = v.reshape(-1)
        return jnp.pad(v, (0, _VEC_COLS - v.shape[0]))[None, :]

    vec_slab = jnp.concatenate(
        [row(sa_bq * scale), row(sa_bk), row(sa_bv), row(sa_bo),
         row(ca_bq * scale), row(ca_bk), row(ca_bv), row(ca_bo),
         row(ff_b1), row(ff_b2),
         row(ln0_g), row(ln0_b), row(ln1_g), row(ln1_b), row(ln2_g), row(ln2_b)],
        axis=0).astype(jnp.float32)                      # (16, 64) f32

    return w_slab, ff_w2.astype(jnp.bfloat16), vec_slab


# ---------------------------------------------------------------------------
# Wrapper: grid over batch, per-batch blocks, resident weight slabs.
# ---------------------------------------------------------------------------
def decode_layer(x, memory, tgt_mask, src_mask, packed):
    w_slab, w2, vec_slab = packed
    B, T, D = x.shape
    S = memory.shape[1]
    assert D == D_MODEL

    x_bf = x.astype(jnp.bfloat16)            # halve activation DMA bytes
    mem_bf = memory.astype(jnp.bfloat16)
    tgt = tgt_mask.astype(jnp.float32)       # masks stay small: (T,T)/(T,S) per step
    src = src_mask.astype(jnp.float32)

    out = pl.pallas_call(
        decode_layer_kernel,
        out_shape=jax.ShapeDtypeStruct((B, T, D), jnp.float32),
        grid=(B,),
        in_specs=[
            pl.BlockSpec((None, T, D), lambda b: (b, 0, 0)),          # x
            pl.BlockSpec((None, S, D), lambda b: (b, 0, 0)),          # memory
            pl.BlockSpec((None, T, T), lambda b: (b, 0, 0)),          # tgt_mask
            pl.BlockSpec((None, T, S), lambda b: (b, 0, 0)),          # src_mask
            pl.BlockSpec((D_MODEL, 8 * D_MODEL + D_FF), lambda b: (0, 0)),  # W
            pl.BlockSpec((D_FF, D_MODEL), lambda b: (0, 0)),          # W2
            pl.BlockSpec((_VEC_ROWS, _VEC_COLS), lambda b: (0, 0)),   # vectors
        ],
        out_specs=pl.BlockSpec((None, T, D), lambda b: (b, 0, 0)),
        compiler_params=pltpu.CompilerParams(
            dimension_semantics=("parallel",)),
    )(x_bf, mem_bf, tgt, src, w_slab, w2, vec_slab)

    return out


# ---------------------------------------------------------------------------
# Deterministic parameter init (synthetic, no checkpoint)
# ---------------------------------------------------------------------------
def init_params(key):
    ks = iter(jax.random.split(key, 32))

    def attn_params():
        wq = jax.random.normal(next(ks), (N_HEADS, D_MODEL, D_HEAD)) / jnp.sqrt(D_MODEL)
        bq = 0.02 * jax.random.normal(next(ks), (N_HEADS, 1, D_HEAD))
        wk = jax.random.normal(next(ks), (N_HEADS, D_MODEL, D_HEAD)) / jnp.sqrt(D_MODEL)
        bk = 0.02 * jax.random.normal(next(ks), (N_HEADS, 1, D_HEAD))
        wv = jax.random.normal(next(ks), (N_HEADS, D_MODEL, D_HEAD)) / jnp.sqrt(D_MODEL)
        bv = 0.02 * jax.random.normal(next(ks), (N_HEADS, 1, D_HEAD))
        wo = jax.random.normal(next(ks), (N_HEADS, D_HEAD, D_MODEL)) / jnp.sqrt(D_MODEL)
        bo = 0.02 * jax.random.normal(next(ks), (1, D_MODEL))
        return (wq, bq, wk, bk, wv, bv, wo, bo)

    sa = attn_params()
    ca = attn_params()
    ff_w1 = jax.random.normal(next(ks), (D_MODEL, D_FF)) / jnp.sqrt(D_MODEL)
    ff_b1 = 0.02 * jax.random.normal(next(ks), (1, D_FF))
    ff_w2 = jax.random.normal(next(ks), (D_FF, D_MODEL)) / jnp.sqrt(D_FF)
    ff_b2 = 0.02 * jax.random.normal(next(ks), (1, D_MODEL))
    lns = []
    for _ in range(3):
        lns.append(1.0 + 0.1 * jax.random.normal(next(ks), (1, D_MODEL)))
        lns.append(0.1 * jax.random.normal(next(ks), (1, D_MODEL)))
    params = sa + ca + (ff_w1, ff_b1, ff_w2, ff_b2) + tuple(lns)
    return tuple(p.astype(jnp.float32) for p in params)


# ---------------------------------------------------------------------------
# Pure-JAX f32 reference (for correctness check)
# ---------------------------------------------------------------------------
def reference(x, memory, tgt_mask, src_mask, params):
    (sa_wq, sa_bq, sa_wk, sa_bk, sa_wv, sa_bv, sa_wo, sa_bo,
     ca_wq, ca_bq, ca_wk, ca_bk, ca_wv, ca_bv, ca_wo, ca_bo,
     ff_w1, ff_b1, ff_w2, ff_b2,
     ln0_g, ln0_b, ln1_g, ln1_b, ln2_g, ln2_b) = params

    def layer_norm(z, g, b):
        mean = jnp.mean(z, axis=-1, keepdims=True)
        var = jnp.sum((z - mean) ** 2, axis=-1, keepdims=True) / (z.shape[-1] - 1)
        return g * (z - mean) / (jnp.sqrt(var) + EPS) + b

    def mha(q_in, kv_in, mask, wq, bq, wk, bk, wv, bv, wo, bo):
        q = jnp.einsum('btd,hdk->bhtk', q_in, wq) + bq[None]
        k = jnp.einsum('bsd,hdk->bhsk', kv_in, wk) + bk[None]
        v = jnp.einsum('bsd,hdk->bhsk', kv_in, wv) + bv[None]
        scores = jnp.einsum('bhtk,bhsk->bhts', q, k) / jnp.sqrt(jnp.float32(D_HEAD))
        scores = jnp.where(mask[:, None, :, :] > 0, scores, NEG_INF)
        p = jax.nn.softmax(scores, axis=-1)
        o = jnp.einsum('bhts,bhsk->bhtk', p, v)
        return jnp.einsum('bhtk,hkd->btd', o, wo) + bo

    y = layer_norm(x, ln0_g, ln0_b)
    x = x + mha(y, y, tgt_mask, sa_wq, sa_bq, sa_wk, sa_bk, sa_wv, sa_bv, sa_wo, sa_bo)
    y = layer_norm(x, ln1_g, ln1_b)
    x = x + mha(y, memory, src_mask, ca_wq, ca_bq, ca_wk, ca_bk, ca_wv, ca_bv, ca_wo, ca_bo)
    y = layer_norm(x, ln2_g, ln2_b)
    h1 = jax.nn.relu(y @ ff_w1 + ff_b1)
    return x + h1 @ ff_w2 + ff_b2


if __name__ == "__main__":
    B, T, S = 2, 8, 8
    key = jax.random.PRNGKey(0)
    kx, kmem, kp = jax.random.split(key, 3)

    x = jax.random.normal(kx, (B, T, D_MODEL), jnp.float32)
    memory = jax.random.normal(kmem, (B, S, D_MODEL), jnp.float32)
    # Causal target mask, full source mask (float {0,1}).
    tgt_mask = jnp.broadcast_to(jnp.tril(jnp.ones((T, T), jnp.float32)), (B, T, T))
    src_mask = jnp.ones((B, T, S), jnp.float32)

    params = init_params(kp)
    packed = pack_params(params)   # hoisted out of the per-call path

    fwd = jax.jit(decode_layer)
    out = fwd(x, memory, tgt_mask, src_mask, packed)
    out = jax.block_until_ready(out)

    ref = reference(x, memory, tgt_mask, src_mask, params)
    assert out.shape == (B, T, D_MODEL)
    max_err = float(jnp.max(jnp.abs(out - ref)))
    # Tolerance budget: bf16 MXU operands (weights + activations) dominate;
    # accumulation/LayerNorm/softmax stay f32, approx reciprocal ~2^-12.
    assert max_err < 8e-2, f"mismatch vs reference: max abs err {max_err}"
    print("KERNEL_OK")
</pallas_src>

<mosaic_0001>
module attributes {stable_mosaic.version = 11 : i64} {
  func.func @decode_layer_kernel(%arg0: i32, %arg1: memref<1x8x32xbf16, #tpu.memory_space<vmem>>, %arg2: memref<1x8x32xbf16, #tpu.memory_space<vmem>>, %arg3: memref<1x8x8xf32, #tpu.memory_space<vmem>>, %arg4: memref<1x8x8xf32, #tpu.memory_space<vmem>>, %arg5: memref<32x320xbf16, #tpu.memory_space<vmem>>, %arg6: memref<64x32xbf16, #tpu.memory_space<vmem>>, %arg7: memref<16x64xf32, #tpu.memory_space<vmem>>, %arg8: memref<1x8x32xf32, #tpu.memory_space<vmem>>) attributes {dimension_semantics = [#tpu.dimension_semantics<parallel>], iteration_bounds = array<i64: 2>, scalar_prefetch = 0 : i64, scratch_operands = 0 : i64, tpu.core_type = #tpu.core_type<tc>, window_params = [{transform_indices = @transform_0, window_bounds = array<i64: 1, 8, 32>}, {transform_indices = @transform_1, window_bounds = array<i64: 1, 8, 32>}, {transform_indices = @transform_2, window_bounds = array<i64: 1, 8, 8>}, {transform_indices = @transform_3, window_bounds = array<i64: 1, 8, 8>}, {pipeline_mode = #tpu.pipeline_mode<synchronous>, transform_indices = @transform_4, window_bounds = array<i64: 32, 320>}, {pipeline_mode = #tpu.pipeline_mode<synchronous>, transform_indices = @transform_5, window_bounds = array<i64: 64, 32>}, {pipeline_mode = #tpu.pipeline_mode<synchronous>, transform_indices = @transform_6, window_bounds = array<i64: 16, 64>}, {transform_indices = @transform_7, window_bounds = array<i64: 1, 8, 32>}]} {
    %c0 = arith.constant 0 : index
    %c0_0 = arith.constant 0 : index
    %c0_1 = arith.constant 0 : index
    %0 = vector.load %arg1[%c0, %c0_0, %c0_1] : memref<1x8x32xbf16, #tpu.memory_space<vmem>>, vector<1x8x32xbf16>
    %1 = vector.shape_cast %0 : vector<1x8x32xbf16> to vector<8x32xbf16>
    %2 = arith.extf %1 : vector<8x32xbf16> to vector<8x32xf32>
    %c0_2 = arith.constant 0 : index
    %c0_3 = arith.constant 0 : index
    %c0_4 = arith.constant 0 : index
    %3 = vector.load %arg2[%c0_2, %c0_3, %c0_4] : memref<1x8x32xbf16, #tpu.memory_space<vmem>>, vector<1x8x32xbf16>
    %4 = vector.shape_cast %3 : vector<1x8x32xbf16> to vector<8x32xbf16>
    %c0_5 = arith.constant 0 : index
    %c0_6 = arith.constant 0 : index
    %5 = vector.load %arg5[%c0_5, %c0_6] : memref<32x320xbf16, #tpu.memory_space<vmem>>, vector<32x320xbf16>
    %c0_7 = arith.constant 0 : index
    %c0_8 = arith.constant 0 : index
    %6 = vector.load %arg6[%c0_7, %c0_8] : memref<64x32xbf16, #tpu.memory_space<vmem>>, vector<64x32xbf16>
    %c0_9 = arith.constant 0 : index
    %c0_10 = arith.constant 0 : index
    %7 = vector.load %arg7[%c0_9, %c0_10] : memref<16x64xf32, #tpu.memory_space<vmem>>, vector<16x64xf32>
    %c0_11 = arith.constant 0 : index
    %c0_12 = arith.constant 0 : index
    %c0_13 = arith.constant 0 : index
    %8 = vector.load %arg3[%c0_11, %c0_12, %c0_13] : memref<1x8x8xf32, #tpu.memory_space<vmem>>, vector<1x8x8xf32>
    %9 = vector.shape_cast %8 : vector<1x8x8xf32> to vector<8x8xf32>
    %cst = arith.constant 1.000000e+00 : f32
    %10 = vector.broadcast %cst : f32 to vector<8x8xf32>
    %11 = arith.subf %9, %10 : vector<8x8xf32>
    %cst_14 = arith.constant 1.000000e+09 : f32
    %12 = vector.broadcast %cst_14 : f32 to vector<8x8xf32>
    %13 = arith.mulf %11, %12 : vector<8x8xf32>
    %c0_15 = arith.constant 0 : index
    %c0_16 = arith.constant 0 : index
    %c0_17 = arith.constant 0 : index
    %14 = vector.load %arg4[%c0_15, %c0_16, %c0_17] : memref<1x8x8xf32, #tpu.memory_space<vmem>>, vector<1x8x8xf32>
    %15 = vector.shape_cast %14 : vector<1x8x8xf32> to vector<8x8xf32>
    %cst_18 = arith.constant 1.000000e+00 : f32
    %16 = vector.broadcast %cst_18 : f32 to vector<8x8xf32>
    %17 = arith.subf %15, %16 : vector<8x8xf32>
    %cst_19 = arith.constant 1.000000e+09 : f32
    %18 = vector.broadcast %cst_19 : f32 to vector<8x8xf32>
    %19 = arith.mulf %17, %18 : vector<8x8xf32>
    %20 = vector.extract_strided_slice %7 {offsets = [10, 0], sizes = [1, 32], strides = [1, 1]} : vector<16x64xf32> to vector<1x32xf32>
    %21 = vector.extract_strided_slice %7 {offsets = [11, 0], sizes = [1, 32], strides = [1, 1]} : vector<16x64xf32> to vector<1x32xf32>
    %cst_20 = arith.constant dense<0.000000e+00> : vector<8xf32>
    %22 = vector.multi_reduction <add>, %2, %cst_20 [1] : vector<8x32xf32> to vector<8xf32>
    %23 = vector.shape_cast %22 : vector<8xf32> to vector<8x1xf32>
    %cst_21 = arith.constant 3.200000e+01 : f32
    %24 = vector.broadcast %cst_21 : f32 to vector<8x1xf32>
    %25 = arith.divf %23, %24 : vector<8x1xf32>
    %26 = vector.broadcast %25 : vector<8x1xf32> to vector<8x32xf32>
    %27 = arith.subf %2, %26 : vector<8x32xf32>
    %28 = arith.mulf %27, %27 : vector<8x32xf32>
    %cst_22 = arith.constant dense<0.000000e+00> : vector<8xf32>
    %29 = vector.multi_reduction <add>, %28, %cst_22 [1] : vector<8x32xf32> to vector<8xf32>
    %30 = vector.shape_cast %29 : vector<8xf32> to vector<8x1xf32>
    %cst_23 = arith.constant 3.100000e+01 : f32
    %31 = vector.broadcast %cst_23 : f32 to vector<8x1xf32>
    %32 = arith.divf %30, %31 : vector<8x1xf32>
    %33 = vector.broadcast %25 : vector<8x1xf32> to vector<8x32xf32>
    %34 = arith.subf %2, %33 : vector<8x32xf32>
    %35 = vector.broadcast %20 : vector<1x32xf32> to vector<8x32xf32>
    %36 = arith.mulf %35, %34 : vector<8x32xf32>
    %37 = math.sqrt %32 : vector<8x1xf32>
    %cst_24 = arith.constant 9.99999997E-7 : f32
    %38 = vector.broadcast %cst_24 : f32 to vector<8x1xf32>
    %39 = arith.addf %37, %38 : vector<8x1xf32>
    %40 = vector.broadcast %39 : vector<8x1xf32> to vector<8x32xf32>
    %41 = arith.divf %36, %40 : vector<8x32xf32>
    %42 = vector.broadcast %21 : vector<1x32xf32> to vector<8x32xf32>
    %43 = arith.addf %41, %42 : vector<8x32xf32>
    %44 = arith.truncf %43 : vector<8x32xf32> to vector<8x32xbf16>
    %45 = vector.extract_strided_slice %5 {offsets = [0, 0], sizes = [32, 96], strides = [1, 1]} : vector<32x320xbf16> to vector<32x96xbf16>
    %cst_25 = arith.constant dense<0.000000e+00> : vector<8x96xf32>
    %46 = tpu.matmul %44, %45, %cst_25 {dimension_numbers = #tpu.dot_dimension_numbers<[1], [0], [0], [1], [0, 0, 1, 1], [], []>} : vector<8x32xbf16>, vector<32x96xbf16>, vector<8x96xf32> -> vector<8x96xf32>
    %47 = vector.extract_strided_slice %46 {offsets = [0, 0], sizes = [8, 32], strides = [1, 1]} : vector<8x96xf32> to vector<8x32xf32>
    %48 = vector.extract_strided_slice %7 {offsets = [0, 0], sizes = [1, 32], strides = [1, 1]} : vector<16x64xf32> to vector<1x32xf32>
    %49 = vector.broadcast %48 : vector<1x32xf32> to vector<8x32xf32>
    %50 = arith.addf %47, %49 : vector<8x32xf32>
    %51 = vector.extract_strided_slice %46 {offsets = [0, 32], sizes = [8, 32], strides = [1, 1]} : vector<8x96xf32> to vector<8x32xf32>
    %52 = vector.extract_strided_slice %7 {offsets = [1, 0], sizes = [1, 32], strides = [1, 1]} : vector<16x64xf32> to vector<1x32xf32>
    %53 = vector.broadcast %52 : vector<1x32xf32> to vector<8x32xf32>
    %54 = arith.addf %51, %53 : vector<8x32xf32>
    %55 = vector.extract_strided_slice %46 {offsets = [0, 64], sizes = [8, 32], strides = [1, 1]} : vector<8x96xf32> to vector<8x32xf32>
    %56 = vector.extract_strided_slice %7 {offsets = [2, 0], sizes = [1, 32], strides = [1, 1]} : vector<16x64xf32> to vector<1x32xf32>
    %57 = vector.broadcast %56 : vector<1x32xf32> to vector<8x32xf32>
    %58 = arith.addf %55, %57 : vector<8x32xf32>
    %59 = vector.extract_strided_slice %50 {offsets = [0, 0], sizes = [8, 8], strides = [1, 1]} : vector<8x32xf32> to vector<8x8xf32>
    %60 = vector.extract_strided_slice %54 {offsets = [0, 0], sizes = [8, 8], strides = [1, 1]} : vector<8x32xf32> to vector<8x8xf32>
    %61 = vector.extract_strided_slice %58 {offsets = [0, 0], sizes = [8, 8], strides = [1, 1]} : vector<8x32xf32> to vector<8x8xf32>
    %cst_26 = arith.constant dense<0.000000e+00> : vector<8x8xf32>
    %62 = tpu.matmul %59, %60, %cst_26 {dimension_numbers = #tpu.dot_dimension_numbers<[1], [1], [0], [0], [0, 0, 1, 0], [], []>} : vector<8x8xf32>, vector<8x8xf32>, vector<8x8xf32> -> vector<8x8xf32>
    %63 = arith.addf %62, %13 : vector<8x8xf32>
    %cst_27 = arith.constant dense<0xFF800000> : vector<8xf32>
    %64 = vector.multi_reduction <maximumf>, %63, %cst_27 [1] : vector<8x8xf32> to vector<8xf32>
    %65 = vector.shape_cast %64 : vector<8xf32> to vector<8x1xf32>
    %66 = vector.broadcast %65 : vector<8x1xf32> to vector<8x8xf32>
    %67 = arith.subf %63, %66 : vector<8x8xf32>
    %68 = math.exp %67 : vector<8x8xf32>
    %cst_28 = arith.constant dense<0.000000e+00> : vector<8xf32>
    %69 = vector.multi_reduction <add>, %68, %cst_28 [1] : vector<8x8xf32> to vector<8xf32>
    %70 = vector.shape_cast %69 : vector<8xf32> to vector<8x1xf32>
    %cst_29 = arith.constant dense<0.000000e+00> : vector<8x8xf32>
    %71 = tpu.matmul %68, %61, %cst_29 {dimension_numbers = #tpu.dot_dimension_numbers<[1], [0], [0], [1], [0, 0, 1, 1], [], []>} : vector<8x8xf32>, vector<8x8xf32>, vector<8x8xf32> -> vector<8x8xf32>
    %72 = tpu.reciprocal %70 {approx = true} : vector<8x1xf32> -> vector<8x1xf32>
    %73 = vector.broadcast %72 : vector<8x1xf32> to vector<8x8xf32>
    %74 = arith.mulf %71, %73 : vector<8x8xf32>
    %75 = vector.extract_strided_slice %50 {offsets = [0, 8], sizes = [8, 8], strides = [1, 1]} : vector<8x32xf32> to vector<8x8xf32>
    %76 = vector.extract_strided_slice %54 {offsets = [0, 8], sizes = [8, 8], strides = [1, 1]} : vector<8x32xf32> to vector<8x8xf32>
    %77 = vector.extract_strided_slice %58 {offsets = [0, 8], sizes = [8, 8], strides = [1, 1]} : vector<8x32xf32> to vector<8x8xf32>
    %cst_30 = arith.constant dense<0.000000e+00> : vector<8x8xf32>
    %78 = tpu.matmul %75, %76, %cst_30 {dimension_numbers = #tpu.dot_dimension_numbers<[1], [1], [0], [0], [0, 0, 1, 0], [], []>} : vector<8x8xf32>, vector<8x8xf32>, vector<8x8xf32> -> vector<8x8xf32>
    %79 = arith.addf %78, %13 : vector<8x8xf32>
    %cst_31 = arith.constant dense<0xFF800000> : vector<8xf32>
    %80 = vector.multi_reduction <maximumf>, %79, %cst_31 [1] : vector<8x8xf32> to vector<8xf32>
    %81 = vector.shape_cast %80 : vector<8xf32> to vector<8x1xf32>
    %82 = vector.broadcast %81 : vector<8x1xf32> to vector<8x8xf32>
    %83 = arith.subf %79, %82 : vector<8x8xf32>
    %84 = math.exp %83 : vector<8x8xf32>
    %cst_32 = arith.constant dense<0.000000e+00> : vector<8xf32>
    %85 = vector.multi_reduction <add>, %84, %cst_32 [1] : vector<8x8xf32> to vector<8xf32>
    %86 = vector.shape_cast %85 : vector<8xf32> to vector<8x1xf32>
    %cst_33 = arith.constant dense<0.000000e+00> : vector<8x8xf32>
    %87 = tpu.matmul %84, %77, %cst_33 {dimension_numbers = #tpu.dot_dimension_numbers<[1], [0], [0], [1], [0, 0, 1, 1], [], []>} : vector<8x8xf32>, vector<8x8xf32>, vector<8x8xf32> -> vector<8x8xf32>
    %88 = tpu.reciprocal %86 {approx = true} : vector<8x1xf32> -> vector<8x1xf32>
    %89 = vector.broadcast %88 : vector<8x1xf32> to vector<8x8xf32>
    %90 = arith.mulf %87, %89 : vector<8x8xf32>
    %91 = vector.extract_strided_slice %50 {offsets = [0, 16], sizes = [8, 8], strides = [1, 1]} : vector<8x32xf32> to vector<8x8xf32>
    %92 = vector.extract_strided_slice %54 {offsets = [0, 16], sizes = [8, 8], strides = [1, 1]} : vector<8x32xf32> to vector<8x8xf32>
    %93 = vector.extract_strided_slice %58 {offsets = [0, 16], sizes = [8, 8], strides = [1, 1]} : vector<8x32xf32> to vector<8x8xf32>
    %cst_34 = arith.constant dense<0.000000e+00> : vector<8x8xf32>
    %94 = tpu.matmul %91, %92, %cst_34 {dimension_numbers = #tpu.dot_dimension_numbers<[1], [1], [0], [0], [0, 0, 1, 0], [], []>} : vector<8x8xf32>, vector<8x8xf32>, vector<8x8xf32> -> vector<8x8xf32>
    %95 = arith.addf %94, %13 : vector<8x8xf32>
    %cst_35 = arith.constant dense<0xFF800000> : vector<8xf32>
    %96 = vector.multi_reduction <maximumf>, %95, %cst_35 [1] : vector<8x8xf32> to vector<8xf32>
    %97 = vector.shape_cast %96 : vector<8xf32> to vector<8x1xf32>
    %98 = vector.broadcast %97 : vector<8x1xf32> to vector<8x8xf32>
    %99 = arith.subf %95, %98 : vector<8x8xf32>
    %100 = math.exp %99 : vector<8x8xf32>
    %cst_36 = arith.constant dense<0.000000e+00> : vector<8xf32>
    %101 = vector.multi_reduction <add>, %100, %cst_36 [1] : vector<8x8xf32> to vector<8xf32>
    %102 = vector.shape_cast %101 : vector<8xf32> to vector<8x1xf32>
    %cst_37 = arith.constant dense<0.000000e+00> : vector<8x8xf32>
    %103 = tpu.matmul %100, %93, %cst_37 {dimension_numbers = #tpu.dot_dimension_numbers<[1], [0], [0], [1], [0, 0, 1, 1], [], []>} : vector<8x8xf32>, vector<8x8xf32>, vector<8x8xf32> -> vector<8x8xf32>
    %104 = tpu.reciprocal %102 {approx = true} : vector<8x1xf32> -> vector<8x1xf32>
    %105 = vector.broadcast %104 : vector<8x1xf32> to vector<8x8xf32>
    %106 = arith.mulf %103, %105 : vector<8x8xf32>
    %107 = vector.extract_strided_slice %50 {offsets = [0, 24], sizes = [8, 8], strides = [1, 1]} : vector<8x32xf32> to vector<8x8xf32>
    %108 = vector.extract_strided_slice %54 {offsets = [0, 24], sizes = [8, 8], strides = [1, 1]} : vector<8x32xf32> to vector<8x8xf32>
    %109 = vector.extract_strided_slice %58 {offsets = [0, 24], sizes = [8, 8], strides = [1, 1]} : vector<8x32xf32> to vector<8x8xf32>
    %cst_38 = arith.constant dense<0.000000e+00> : vector<8x8xf32>
    %110 = tpu.matmul %107, %108, %cst_38 {dimension_numbers = #tpu.dot_dimension_numbers<[1], [1], [0], [0], [0, 0, 1, 0], [], []>} : vector<8x8xf32>, vector<8x8xf32>, vector<8x8xf32> -> vector<8x8xf32>
    %111 = arith.addf %110, %13 : vector<8x8xf32>
    %cst_39 = arith.constant dense<0xFF800000> : vector<8xf32>
    %112 = vector.multi_reduction <maximumf>, %111, %cst_39 [1] : vector<8x8xf32> to vector<8xf32>
    %113 = vector.shape_cast %112 : vector<8xf32> to vector<8x1xf32>
    %114 = vector.broadcast %113 : vector<8x1xf32> to vector<8x8xf32>
    %115 = arith.subf %111, %114 : vector<8x8xf32>
    %116 = math.exp %115 : vector<8x8xf32>
    %cst_40 = arith.constant dense<0.000000e+00> : vector<8xf32>
    %117 = vector.multi_reduction <add>, %116, %cst_40 [1] : vector<8x8xf32> to vector<8xf32>
    %118 = vector.shape_cast %117 : vector<8xf32> to vector<8x1xf32>
    %cst_41 = arith.constant dense<0.000000e+00> : vector<8x8xf32>
    %119 = tpu.matmul %116, %109, %cst_41 {dimension_numbers = #tpu.dot_dimension_numbers<[1], [0], [0], [1], [0, 0, 1, 1], [], []>} : vector<8x8xf32>, vector<8x8xf32>, vector<8x8xf32> -> vector<8x8xf32>
    %120 = tpu.reciprocal %118 {approx = true} : vector<8x1xf32> -> vector<8x1xf32>
    %121 = vector.broadcast %120 : vector<8x1xf32> to vector<8x8xf32>
    %122 = arith.mulf %119, %121 : vector<8x8xf32>
    %123 = tpu.concatenate %74, %90, %106, %122 in 1 : vector<8x8xf32>, vector<8x8xf32>, vector<8x8xf32>, vector<8x8xf32> -> vector<8x32xf32>
    %124 = arith.truncf %123 : vector<8x32xf32> to vector<8x32xbf16>
    %125 = vector.extract_strided_slice %5 {offsets = [0, 96], sizes = [32, 32], strides = [1, 1]} : vector<32x320xbf16> to vector<32x32xbf16>
    %cst_42 = arith.constant dense<0.000000e+00> : vector<8x32xf32>
    %126 = tpu.matmul %124, %125, %cst_42 {dimension_numbers = #tpu.dot_dimension_numbers<[1], [0], [0], [1], [0, 0, 1, 1], [], []>} : vector<8x32xbf16>, vector<32x32xbf16>, vector<8x32xf32> -> vector<8x32xf32>
    %127 = vector.extract_strided_slice %7 {offsets = [3, 0], sizes = [1, 32], strides = [1, 1]} : vector<16x64xf32> to vector<1x32xf32>
    %128 = vector.broadcast %127 : vector<1x32xf32> to vector<8x32xf32>
    %129 = arith.addf %126, %128 : vector<8x32xf32>
    %130 = arith.addf %2, %129 : vector<8x32xf32>
    %131 = vector.extract_strided_slice %7 {offsets = [12, 0], sizes = [1, 32], strides = [1, 1]} : vector<16x64xf32> to vector<1x32xf32>
    %132 = vector.extract_strided_slice %7 {offsets = [13, 0], sizes = [1, 32], strides = [1, 1]} : vector<16x64xf32> to vector<1x32xf32>
    %cst_43 = arith.constant dense<0.000000e+00> : vector<8xf32>
    %133 = vector.multi_reduction <add>, %130, %cst_43 [1] : vector<8x32xf32> to vector<8xf32>
    %134 = vector.shape_cast %133 : vector<8xf32> to vector<8x1xf32>
    %cst_44 = arith.constant 3.200000e+01 : f32
    %135 = vector.broadcast %cst_44 : f32 to vector<8x1xf32>
    %136 = arith.divf %134, %135 : vector<8x1xf32>
    %137 = vector.broadcast %136 : vector<8x1xf32> to vector<8x32xf32>
    %138 = arith.subf %130, %137 : vector<8x32xf32>
    %139 = arith.mulf %138, %138 : vector<8x32xf32>
    %cst_45 = arith.constant dense<0.000000e+00> : vector<8xf32>
    %140 = vector.multi_reduction <add>, %139, %cst_45 [1] : vector<8x32xf32> to vector<8xf32>
    %141 = vector.shape_cast %140 : vector<8xf32> to vector<8x1xf32>
    %cst_46 = arith.constant 3.100000e+01 : f32
    %142 = vector.broadcast %cst_46 : f32 to vector<8x1xf32>
    %143 = arith.divf %141, %142 : vector<8x1xf32>
    %144 = vector.broadcast %136 : vector<8x1xf32> to vector<8x32xf32>
    %145 = arith.subf %130, %144 : vector<8x32xf32>
    %146 = vector.broadcast %131 : vector<1x32xf32> to vector<8x32xf32>
    %147 = arith.mulf %146, %145 : vector<8x32xf32>
    %148 = math.sqrt %143 : vector<8x1xf32>
    %cst_47 = arith.constant 9.99999997E-7 : f32
    %149 = vector.broadcast %cst_47 : f32 to vector<8x1xf32>
    %150 = arith.addf %148, %149 : vector<8x1xf32>
    %151 = vector.broadcast %150 : vector<8x1xf32> to vector<8x32xf32>
    %152 = arith.divf %147, %151 : vector<8x32xf32>
    %153 = vector.broadcast %132 : vector<1x32xf32> to vector<8x32xf32>
    %154 = arith.addf %152, %153 : vector<8x32xf32>
    %155 = arith.truncf %154 : vector<8x32xf32> to vector<8x32xbf16>
    %156 = vector.extract_strided_slice %5 {offsets = [0, 128], sizes = [32, 32], strides = [1, 1]} : vector<32x320xbf16> to vector<32x32xbf16>
    %cst_48 = arith.constant dense<0.000000e+00> : vector<8x32xf32>
    %157 = tpu.matmul %155, %156, %cst_48 {dimension_numbers = #tpu.dot_dimension_numbers<[1], [0], [0], [1], [0, 0, 1, 1], [], []>} : vector<8x32xbf16>, vector<32x32xbf16>, vector<8x32xf32> -> vector<8x32xf32>
    %158 = vector.extract_strided_slice %7 {offsets = [4, 0], sizes = [1, 32], strides = [1, 1]} : vector<16x64xf32> to vector<1x32xf32>
    %159 = vector.broadcast %158 : vector<1x32xf32> to vector<8x32xf32>
    %160 = arith.addf %157, %159 : vector<8x32xf32>
    %161 = vector.extract_strided_slice %5 {offsets = [0, 160], sizes = [32, 64], strides = [1, 1]} : vector<32x320xbf16> to vector<32x64xbf16>
    %cst_49 = arith.constant dense<0.000000e+00> : vector<8x64xf32>
    %162 = tpu.matmul %4, %161, %cst_49 {dimension_numbers = #tpu.dot_dimension_numbers<[1], [0], [0], [1], [0, 0, 1, 1], [], []>} : vector<8x32xbf16>, vector<32x64xbf16>, vector<8x64xf32> -> vector<8x64xf32>
    %163 = vector.extract_strided_slice %162 {offsets = [0, 0], sizes = [8, 32], strides = [1, 1]} : vector<8x64xf32> to vector<8x32xf32>
    %164 = vector.extract_strided_slice %7 {offsets = [5, 0], sizes = [1, 32], strides = [1, 1]} : vector<16x64xf32> to vector<1x32xf32>
    %165 = vector.broadcast %164 : vector<1x32xf32> to vector<8x32xf32>
    %166 = arith.addf %163, %165 : vector<8x32xf32>
    %167 = vector.extract_strided_slice %162 {offsets = [0, 32], sizes = [8, 32], strides = [1, 1]} : vector<8x64xf32> to vector<8x32xf32>
    %168 = vector.extract_strided_slice %7 {offsets = [6, 0], sizes = [1, 32], strides = [1, 1]} : vector<16x64xf32> to vector<1x32xf32>
    %169 = vector.broadcast %168 : vector<1x32xf32> to vector<8x32xf32>
    %170 = arith.addf %167, %169 : vector<8x32xf32>
    %171 = vector.extract_strided_slice %160 {offsets = [0, 0], sizes = [8, 8], strides = [1, 1]} : vector<8x32xf32> to vector<8x8xf32>
    %172 = vector.extract_strided_slice %166 {offsets = [0, 0], sizes = [8, 8], strides = [1, 1]} : vector<8x32xf32> to vector<8x8xf32>
    %173 = vector.extract_strided_slice %170 {offsets = [0, 0], sizes = [8, 8], strides = [1, 1]} : vector<8x32xf32> to vector<8x8xf32>
    %cst_50 = arith.constant dense<0.000000e+00> : vector<8x8xf32>
    %174 = tpu.matmul %171, %172, %cst_50 {dimension_numbers = #tpu.dot_dimension_numbers<[1], [1], [0], [0], [0, 0, 1, 0], [], []>} : vector<8x8xf32>, vector<8x8xf32>, vector<8x8xf32> -> vector<8x8xf32>
    %175 = arith.addf %174, %19 : vector<8x8xf32>
    %cst_51 = arith.constant dense<0xFF800000> : vector<8xf32>
    %176 = vector.multi_reduction <maximumf>, %175, %cst_51 [1] : vector<8x8xf32> to vector<8xf32>
    %177 = vector.shape_cast %176 : vector<8xf32> to vector<8x1xf32>
    %178 = vector.broadcast %177 : vector<8x1xf32> to vector<8x8xf32>
    %179 = arith.subf %175, %178 : vector<8x8xf32>
    %180 = math.exp %179 : vector<8x8xf32>
    %cst_52 = arith.constant dense<0.000000e+00> : vector<8xf32>
    %181 = vector.multi_reduction <add>, %180, %cst_52 [1] : vector<8x8xf32> to vector<8xf32>
    %182 = vector.shape_cast %181 : vector<8xf32> to vector<8x1xf32>
    %cst_53 = arith.constant dense<0.000000e+00> : vector<8x8xf32>
    %183 = tpu.matmul %180, %173, %cst_53 {dimension_numbers = #tpu.dot_dimension_numbers<[1], [0], [0], [1], [0, 0, 1, 1], [], []>} : vector<8x8xf32>, vector<8x8xf32>, vector<8x8xf32> -> vector<8x8xf32>
    %184 = tpu.reciprocal %182 {approx = true} : vector<8x1xf32> -> vector<8x1xf32>
    %185 = vector.broadcast %184 : vector<8x1xf32> to vector<8x8xf32>
    %186 = arith.mulf %183, %185 : vector<8x8xf32>
    %187 = vector.extract_strided_slice %160 {offsets = [0, 8], sizes = [8, 8], strides = [1, 1]} : vector<8x32xf32> to vector<8x8xf32>
    %188 = vector.extract_strided_slice %166 {offsets = [0, 8], sizes = [8, 8], strides = [1, 1]} : vector<8x32xf32> to vector<8x8xf32>
    %189 = vector.extract_strided_slice %170 {offsets = [0, 8], sizes = [8, 8], strides = [1, 1]} : vector<8x32xf32> to vector<8x8xf32>
    %cst_54 = arith.constant dense<0.000000e+00> : vector<8x8xf32>
    %190 = tpu.matmul %187, %188, %cst_54 {dimension_numbers = #tpu.dot_dimension_numbers<[1], [1], [0], [0], [0, 0, 1, 0], [], []>} : vector<8x8xf32>, vector<8x8xf32>, vector<8x8xf32> -> vector<8x8xf32>
    %191 = arith.addf %190, %19 : vector<8x8xf32>
    %cst_55 = arith.constant dense<0xFF800000> : vector<8xf32>
    %192 = vector.multi_reduction <maximumf>, %191, %cst_55 [1] : vector<8x8xf32> to vector<8xf32>
    %193 = vector.shape_cast %192 : vector<8xf32> to vector<8x1xf32>
    %194 = vector.broadcast %193 : vector<8x1xf32> to vector<8x8xf32>
    %195 = arith.subf %191, %194 : vector<8x8xf32>
    %196 = math.exp %195 : vector<8x8xf32>
    %cst_56 = arith.constant dense<0.000000e+00> : vector<8xf32>
    %197 = vector.multi_reduction <add>, %196, %cst_56 [1] : vector<8x8xf32> to vector<8xf32>
    %198 = vector.shape_cast %197 : vector<8xf32> to vector<8x1xf32>
    %cst_57 = arith.constant dense<0.000000e+00> : vector<8x8xf32>
    %199 = tpu.matmul %196, %189, %cst_57 {dimension_numbers = #tpu.dot_dimension_numbers<[1], [0], [0], [1], [0, 0, 1, 1], [], []>} : vector<8x8xf32>, vector<8x8xf32>, vector<8x8xf32> -> vector<8x8xf32>
    %200 = tpu.reciprocal %198 {approx = true} : vector<8x1xf32> -> vector<8x1xf32>
    %201 = vector.broadcast %200 : vector<8x1xf32> to vector<8x8xf32>
    %202 = arith.mulf %199, %201 : vector<8x8xf32>
    %203 = vector.extract_strided_slice %160 {offsets = [0, 16], sizes = [8, 8], strides = [1, 1]} : vector<8x32xf32> to vector<8x8xf32>
    %204 = vector.extract_strided_slice %166 {offsets = [0, 16], sizes = [8, 8], strides = [1, 1]} : vector<8x32xf32> to vector<8x8xf32>
    %205 = vector.extract_strided_slice %170 {offsets = [0, 16], sizes = [8, 8], strides = [1, 1]} : vector<8x32xf32> to vector<8x8xf32>
    %cst_58 = arith.constant dense<0.000000e+00> : vector<8x8xf32>
    %206 = tpu.matmul %203, %204, %cst_58 {dimension_numbers = #tpu.dot_dimension_numbers<[1], [1], [0], [0], [0, 0, 1, 0], [], []>} : vector<8x8xf32>, vector<8x8xf32>, vector<8x8xf32> -> vector<8x8xf32>
    %207 = arith.addf %206, %19 : vector<8x8xf32>
    %cst_59 = arith.constant dense<0xFF800000> : vector<8xf32>
    %208 = vector.multi_reduction <maximumf>, %207, %cst_59 [1] : vector<8x8xf32> to vector<8xf32>
    %209 = vector.shape_cast %208 : vector<8xf32> to vector<8x1xf32>
    %210 = vector.broadcast %209 : vector<8x1xf32> to vector<8x8xf32>
    %211 = arith.subf %207, %210 : vector<8x8xf32>
    %212 = math.exp %211 : vector<8x8xf32>
    %cst_60 = arith.constant dense<0.000000e+00> : vector<8xf32>
    %213 = vector.multi_reduction <add>, %212, %cst_60 [1] : vector<8x8xf32> to vector<8xf32>
    %214 = vector.shape_cast %213 : vector<8xf32> to vector<8x1xf32>
    %cst_61 = arith.constant dense<0.000000e+00> : vector<8x8xf32>
    %215 = tpu.matmul %212, %205, %cst_61 {dimension_numbers = #tpu.dot_dimension_numbers<[1], [0], [0], [1], [0, 0, 1, 1], [], []>} : vector<8x8xf32>, vector<8x8xf32>, vector<8x8xf32> -> vector<8x8xf32>
    %216 = tpu.reciprocal %214 {approx = true} : vector<8x1xf32> -> vector<8x1xf32>
    %217 = vector.broadcast %216 : vector<8x1xf32> to vector<8x8xf32>
    %218 = arith.mulf %215, %217 : vector<8x8xf32>
    %219 = vector.extract_strided_slice %160 {offsets = [0, 24], sizes = [8, 8], strides = [1, 1]} : vector<8x32xf32> to vector<8x8xf32>
    %220 = vector.extract_strided_slice %166 {offsets = [0, 24], sizes = [8, 8], strides = [1, 1]} : vector<8x32xf32> to vector<8x8xf32>
    %221 = vector.extract_strided_slice %170 {offsets = [0, 24], sizes = [8, 8], strides = [1, 1]} : vector<8x32xf32> to vector<8x8xf32>
    %cst_62 = arith.constant dense<0.000000e+00> : vector<8x8xf32>
    %222 = tpu.matmul %219, %220, %cst_62 {dimension_numbers = #tpu.dot_dimension_numbers<[1], [1], [0], [0], [0, 0, 1, 0], [], []>} : vector<8x8xf32>, vector<8x8xf32>, vector<8x8xf32> -> vector<8x8xf32>
    %223 = arith.addf %222, %19 : vector<8x8xf32>
    %cst_63 = arith.constant dense<0xFF800000> : vector<8xf32>
    %224 = vector.multi_reduction <maximumf>, %223, %cst_63 [1] : vector<8x8xf32> to vector<8xf32>
    %225 = vector.shape_cast %224 : vector<8xf32> to vector<8x1xf32>
    %226 = vector.broadcast %225 : vector<8x1xf32> to vector<8x8xf32>
    %227 = arith.subf %223, %226 : vector<8x8xf32>
    %228 = math.exp %227 : vector<8x8xf32>
    %cst_64 = arith.constant dense<0.000000e+00> : vector<8xf32>
    %229 = vector.multi_reduction <add>, %228, %cst_64 [1] : vector<8x8xf32> to vector<8xf32>
    %230 = vector.shape_cast %229 : vector<8xf32> to vector<8x1xf32>
    %cst_65 = arith.constant dense<0.000000e+00> : vector<8x8xf32>
    %231 = tpu.matmul %228, %221, %cst_65 {dimension_numbers = #tpu.dot_dimension_numbers<[1], [0], [0], [1], [0, 0, 1, 1], [], []>} : vector<8x8xf32>, vector<8x8xf32>, vector<8x8xf32> -> vector<8x8xf32>
    %232 = tpu.reciprocal %230 {approx = true} : vector<8x1xf32> -> vector<8x1xf32>
    %233 = vector.broadcast %232 : vector<8x1xf32> to vector<8x8xf32>
    %234 = arith.mulf %231, %233 : vector<8x8xf32>
    %235 = tpu.concatenate %186, %202, %218, %234 in 1 : vector<8x8xf32>, vector<8x8xf32>, vector<8x8xf32>, vector<8x8xf32> -> vector<8x32xf32>
    %236 = arith.truncf %235 : vector<8x32xf32> to vector<8x32xbf16>
    %237 = vector.extract_strided_slice %5 {offsets = [0, 224], sizes = [32, 32], strides = [1, 1]} : vector<32x320xbf16> to vector<32x32xbf16>
    %cst_66 = arith.constant dense<0.000000e+00> : vector<8x32xf32>
    %238 = tpu.matmul %236, %237, %cst_66 {dimension_numbers = #tpu.dot_dimension_numbers<[1], [0], [0], [1], [0, 0, 1, 1], [], []>} : vector<8x32xbf16>, vector<32x32xbf16>, vector<8x32xf32> -> vector<8x32xf32>
    %239 = vector.extract_strided_slice %7 {offsets = [7, 0], sizes = [1, 32], strides = [1, 1]} : vector<16x64xf32> to vector<1x32xf32>
    %240 = vector.broadcast %239 : vector<1x32xf32> to vector<8x32xf32>
    %241 = arith.addf %238, %240 : vector<8x32xf32>
    %242 = arith.addf %130, %241 : vector<8x32xf32>
    %243 = vector.extract_strided_slice %7 {offsets = [14, 0], sizes = [1, 32], strides = [1, 1]} : vector<16x64xf32> to vector<1x32xf32>
    %244 = vector.extract_strided_slice %7 {offsets = [15, 0], sizes = [1, 32], strides = [1, 1]} : vector<16x64xf32> to vector<1x32xf32>
    %cst_67 = arith.constant dense<0.000000e+00> : vector<8xf32>
    %245 = vector.multi_reduction <add>, %242, %cst_67 [1] : vector<8x32xf32> to vector<8xf32>
    %246 = vector.shape_cast %245 : vector<8xf32> to vector<8x1xf32>
    %cst_68 = arith.constant 3.200000e+01 : f32
    %247 = vector.broadcast %cst_68 : f32 to vector<8x1xf32>
    %248 = arith.divf %246, %247 : vector<8x1xf32>
    %249 = vector.broadcast %248 : vector<8x1xf32> to vector<8x32xf32>
    %250 = arith.subf %242, %249 : vector<8x32xf32>
    %251 = arith.mulf %250, %250 : vector<8x32xf32>
    %cst_69 = arith.constant dense<0.000000e+00> : vector<8xf32>
    %252 = vector.multi_reduction <add>, %251, %cst_69 [1] : vector<8x32xf32> to vector<8xf32>
    %253 = vector.shape_cast %252 : vector<8xf32> to vector<8x1xf32>
    %cst_70 = arith.constant 3.100000e+01 : f32
    %254 = vector.broadcast %cst_70 : f32 to vector<8x1xf32>
    %255 = arith.divf %253, %254 : vector<8x1xf32>
    %256 = vector.broadcast %248 : vector<8x1xf32> to vector<8x32xf32>
    %257 = arith.subf %242, %256 : vector<8x32xf32>
    %258 = vector.broadcast %243 : vector<1x32xf32> to vector<8x32xf32>
    %259 = arith.mulf %258, %257 : vector<8x32xf32>
    %260 = math.sqrt %255 : vector<8x1xf32>
    %cst_71 = arith.constant 9.99999997E-7 : f32
    %261 = vector.broadcast %cst_71 : f32 to vector<8x1xf32>
    %262 = arith.addf %260, %261 : vector<8x1xf32>
    %263 = vector.broadcast %262 : vector<8x1xf32> to vector<8x32xf32>
    %264 = arith.divf %259, %263 : vector<8x32xf32>
    %265 = vector.broadcast %244 : vector<1x32xf32> to vector<8x32xf32>
    %266 = arith.addf %264, %265 : vector<8x32xf32>
    %267 = arith.truncf %266 : vector<8x32xf32> to vector<8x32xbf16>
    %268 = vector.extract_strided_slice %5 {offsets = [0, 256], sizes = [32, 64], strides = [1, 1]} : vector<32x320xbf16> to vector<32x64xbf16>
    %cst_72 = arith.constant dense<0.000000e+00> : vector<8x64xf32>
    %269 = tpu.matmul %267, %268, %cst_72 {dimension_numbers = #tpu.dot_dimension_numbers<[1], [0], [0], [1], [0, 0, 1, 1], [], []>} : vector<8x32xbf16>, vector<32x64xbf16>, vector<8x64xf32> -> vector<8x64xf32>
    %270 = vector.extract_strided_slice %7 {offsets = [8, 0], sizes = [1, 64], strides = [1, 1]} : vector<16x64xf32> to vector<1x64xf32>
    %271 = vector.broadcast %270 : vector<1x64xf32> to vector<8x64xf32>
    %272 = arith.addf %269, %271 : vector<8x64xf32>
    %cst_73 = arith.constant 0.000000e+00 : f32
    %273 = vector.broadcast %cst_73 : f32 to vector<8x64xf32>
    %274 = arith.maximumf %272, %273 : vector<8x64xf32>
    %275 = arith.truncf %274 : vector<8x64xf32> to vector<8x64xbf16>
    %cst_74 = arith.constant dense<0.000000e+00> : vector<8x32xf32>
    %276 = tpu.matmul %275, %6, %cst_74 {dimension_numbers = #tpu.dot_dimension_numbers<[1], [0], [0], [1], [0, 0, 1, 1], [], []>} : vector<8x64xbf16>, vector<64x32xbf16>, vector<8x32xf32> -> vector<8x32xf32>
    %277 = vector.extract_strided_slice %7 {offsets = [9, 0], sizes = [1, 32], strides = [1, 1]} : vector<16x64xf32> to vector<1x32xf32>
    %278 = vector.broadcast %277 : vector<1x32xf32> to vector<8x32xf32>
    %279 = arith.addf %276, %278 : vector<8x32xf32>
    %280 = arith.addf %242, %279 : vector<8x32xf32>
    %c0_75 = arith.constant 0 : index
    %c0_76 = arith.constant 0 : index
    %c0_77 = arith.constant 0 : index
    %281 = vector.load %arg8[%c0_75, %c0_76, %c0_77] : memref<1x8x32xf32, #tpu.memory_space<vmem>>, vector<1x8x32xf32>
    %282 = vector.shape_cast %281 : vector<1x8x32xf32> to vector<8x32xf32>
    %283 = vector.shape_cast %280 : vector<8x32xf32> to vector<1x8x32xf32>
    tpu.vector_store %arg8[%c0_75, %c0_76, %c0_77], %283 {strides = array<i32>} : memref<1x8x32xf32, #tpu.memory_space<vmem>>, vector<1x8x32xf32>,
    return
  }
  func.func @transform_0(%arg0: i32) -> (i32, i32, i32) {
    %c0_i32 = arith.constant 0 : i32
    %c0_i32_0 = arith.constant 0 : i32
    %c0_i32_1 = arith.constant 0 : i32
    return %arg0, %c0_i32, %c0_i32_0 : i32, i32, i32
  }
  func.func @transform_1(%arg0: i32) -> (i32, i32, i32) {
    %c0_i32 = arith.constant 0 : i32
    %c0_i32_0 = arith.constant 0 : i32
    %c0_i32_1 = arith.constant 0 : i32
    return %arg0, %c0_i32, %c0_i32_0 : i32, i32, i32
  }
  func.func @transform_2(%arg0: i32) -> (i32, i32, i32) {
    %c0_i32 = arith.constant 0 : i32
    %c0_i32_0 = arith.constant 0 : i32
    %c0_i32_1 = arith.constant 0 : i32
    return %arg0, %c0_i32, %c0_i32_0 : i32, i32, i32
  }
  func.func @transform_3(%arg0: i32) -> (i32, i32, i32) {
    %c0_i32 = arith.constant 0 : i32
    %c0_i32_0 = arith.constant 0 : i32
    %c0_i32_1 = arith.constant 0 : i32
    return %arg0, %c0_i32, %c0_i32_0 : i32, i32, i32
  }
  func.func @transform_4(%arg0: i32) -> (i32, i32) {
    %c0_i32 = arith.constant 0 : i32
    %c0_i32_0 = arith.constant 0 : i32
    %c0_i32_1 = arith.constant 0 : i32
    return %c0_i32, %c0_i32_0 : i32, i32
  }
  func.func @transform_5(%arg0: i32) -> (i32, i32) {
    %c0_i32 = arith.constant 0 : i32
    %c0_i32_0 = arith.constant 0 : i32
    %c0_i32_1 = arith.constant 0 : i32
    return %c0_i32, %c0_i32_0 : i32, i32
  }
  func.func @transform_6(%arg0: i32) -> (i32, i32) {
    %c0_i32 = arith.constant 0 : i32
    %c0_i32_0 = arith.constant 0 : i32
    %c0_i32_1 = arith.constant 0 : i32
    return %c0_i32, %c0_i32_0 : i32, i32
  }
  func.func @transform_7(%arg0: i32) -> (i32, i32, i32) {
    %c0_i32 = arith.constant 0 : i32
    %c0_i32_0 = arith.constant 0 : i32
    %c0_i32_1 = arith.constant 0 : i32
    return %arg0, %c0_i32, %c0_i32_0 : i32, i32, i32
  }
}

</mosaic_0001>

<llo_original>
// kernel: decode_layer.1
$region0: #{decode_layer.1}
  #allocation0 [shape = 'u32[]', space=smem, size = 0x4, offset = 0x4, fixed_abs, tag = 'smem constant byte address 0x4 - core index']
  #allocation1 [shape = 'u32[72,128]{1,0:T(1,128)}', space=vmem, size = 0x9000, scoped, tag = 'internal scratch']
  %s0 = inlined_call_operand.vmem [shape: bf16[2,8,32], index: 0, kind: input, shape index: {}]
  %s1 = inlined_call_operand.vmem [shape: bf16[2,8,32], index: 1, kind: input, shape index: {}]
  %s2 = inlined_call_operand.vmem [shape: f32[2,8,8], index: 2, kind: input, shape index: {}]
  %s3 = inlined_call_operand.hbm [shape: f32[2,8,8], index: 3, kind: input, shape index: {}]
  %s4 = inlined_call_operand.vmem [shape: bf16[32,320], index: 4, kind: input, shape index: {}]
  %s5 = inlined_call_operand.vmem [shape: bf16[64,32], index: 5, kind: input, shape index: {}]
  %s6 = inlined_call_operand.hbm [shape: f32[16,64], index: 6, kind: input, shape index: {}]
  %s7 = inlined_call_operand.hbm [shape: f32[2,8,32], index: 7, kind: output, shape index: {}]
  %s8 = sld [smem:[#allocation0]]
  $region69: #{decode_layer.1} parent=0
    _
  %s10 = ssub.s32 1, %s8
  %s11 = scalar_select 0, %s10, %s8
  $region1: #{decode_layer.1} parent=0
    #allocation2 [shape = 'u8[8192]{0}', space=vmem, size = 0x2000, scoped, tag = 'input window, operand 3']
    #allocation3 [shape = 's32[2]{0}', space=sflag, size = 0x8, scoped, tag = 'scoped memory for decode_layer.1']
    #allocation4 [shape = 's32[2]{0}', space=sflag, size = 0x8, scoped, tag = 'scoped memory for decode_layer.1']
    #allocation5 [shape = 'u8[8192]{0}', space=vmem, size = 0x2000, scoped, tag = 'input window, operand 6, single buffered']
    #allocation6 [shape = 's32[1]{0}', space=sflag, size = 0x4, scoped, tag = 'scoped memory for decode_layer.1']
    #allocation7 [shape = 'u8[8192]{0}', space=vmem, size = 0x2000, scoped, tag = 'output window, operand 0']
    %12 = vsyncpa [#allocation3], 0
    %s13 = scalar_lea.sflag [#allocation3], 1
    %14 = vsyncpa %s13, 0
    %15 = vsyncpa [#allocation6], 0
    %16 = vsyncpa [#allocation4], 0
    %s17 = scalar_lea.sflag [#allocation4], 1
    %18 = vsyncpa %s17, 0
    loop: start=0, step=1, limit=4
    $region2: #{decode_layer.1} parent=1 // loop_pre_header
      _
    $region3: #{decode_layer.1} parent=1 // loop_header
      %s20 = sphi 0, %s24
      %p21 = scmp.ge.s32.totalorder %s20, 4
      %s30 = sphi 0, %s32
      %s33 = sphi 0, %s30
      %s34 = sphi 0, %s33
      %s50 = sphi 0, %s34
      %s56 = sphi 0, %s58
      %s59 = sphi 0, %s56
      %s60 = sphi 0, %s59
      %s76 = sphi 0, %s60
      %s82 = sphi 0, %s84
      %s85 = sphi 0, %s82
      %s86 = sphi 0, %s85
      %s102 = sphi 0, %s86
      %s108 = sphi 0, %s110
      %s111 = sphi 0, %s108
      %s112 = sphi 0, %s111
      %s128 = sphi 0, %s112
      %s132 = sphi 0, %s132
      %s134 = sphi 0, %s132
      %s135 = sphi 0, %s134
      %s149 = sphi 0, %s135
      %s153 = sphi 0, %s153
      %s155 = sphi 0, %s153
      %s156 = sphi 0, %s155
      %s170 = sphi 0, %s156
      %s174 = sphi 0, %s174
      %s176 = sphi 0, %s174
      %s177 = sphi 0, %s176
      %s191 = sphi 0, %s177
      %s197 = sphi 0, %s199
      %s200 = sphi 0, %s197
      %s201 = sphi 0, %s200
      %s217 = sphi 0, %s201
    $region4: #{decode_layer.1} parent=1 // loop_header_branch
      %23 = sbr.rel (%p21) target = $region8
    $region5: #{decode_layer.1} parent=1 // loop_body
      %s25 = ssub.s32 %s20, 1
      %s26 = ssub.s32 %s20, 2
      %s27 = sadd.s32 %s20, 1
      %s28 = ssub.s32 %s20, %s27
      %p29 = scmp.eq.s32.totalorder %s28, 0
      %s31 = sadd.s32 %s30, 1
      %s32 = scalar_select %p29, %s30, %s31
      %p35 = pneg %p29
      %p36 = scmp.eq.s32.totalorder %s20, 1
      %p37 = por %p35, %p36
      %p38 = scmp.ne.s32.totalorder %s30, %s33
      %p39 = scmp.eq.s32.totalorder %s20, 0
      %p40 = por %p38, %p39
      %p41 = scmp.ne.s32.totalorder %s30, %s33
      %p42 = scmp.eq.s32.totalorder %s25, 1
      %p43 = por %p41, %p42
      %p44 = scmp.ne.s32.totalorder %s33, %s34
      %p45 = scmp.eq.s32.totalorder %s25, 0
      %p46 = por %p44, %p45
      %p47 = scmp.ne.s32.totalorder %s33, %s34
      %p48 = scmp.eq.s32.totalorder %s26, 1
      %p49 = por %p47, %p48
      %p51 = scmp.ne.s32.totalorder %s34, %s50
      %p52 = scmp.eq.s32.totalorder %s26, 0
      %p53 = por %p51, %p52
      %s54 = ssub.s32 %s20, %s27
      %p55 = scmp.eq.s32.totalorder %s54, 0
      %s57 = sadd.s32 %s56, 1
      %s58 = scalar_select %p55, %s56, %s57
      %p61 = pneg %p55
      %p62 = scmp.eq.s32.totalorder %s20, 1
      %p63 = por %p61, %p62
      %p64 = scmp.ne.s32.totalorder %s56, %s59
      %p65 = scmp.eq.s32.totalorder %s20, 0
      %p66 = por %p64, %p65
      %p67 = scmp.ne.s32.totalorder %s56, %s59
      %p68 = scmp.eq.s32.totalorder %s25, 1
      %p69 = por %p67, %p68
      %p70 = scmp.ne.s32.totalorder %s59, %s60
      %p71 = scmp.eq.s32.totalorder %s25, 0
      %p72 = por %p70, %p71
      %p73 = scmp.ne.s32.totalorder %s59, %s60
      %p74 = scmp.eq.s32.totalorder %s26, 1
      %p75 = por %p73, %p74
      %p77 = scmp.ne.s32.totalorder %s60, %s76
      %p78 = scmp.eq.s32.totalorder %s26, 0
      %p79 = por %p77, %p78
      %s80 = ssub.s32 %s20, %s27
      %p81 = scmp.eq.s32.totalorder %s80, 0
      %s83 = sadd.s32 %s82, 1
      %s84 = scalar_select %p81, %s82, %s83
      %p87 = pneg %p81
      %p88 = scmp.eq.s32.totalorder %s20, 1
      %p89 = por %p87, %p88
      %p90 = scmp.ne.s32.totalorder %s82, %s85
      %p91 = scmp.eq.s32.totalorder %s20, 0
      %p92 = por %p90, %p91
      %p93 = scmp.ne.s32.totalorder %s82, %s85
      %p94 = scmp.eq.s32.totalorder %s25, 1
      %p95 = por %p93, %p94
      %p96 = scmp.ne.s32.totalorder %s85, %s86
      %p97 = scmp.eq.s32.totalorder %s25, 0
      %p98 = por %p96, %p97
      %p99 = scmp.ne.s32.totalorder %s85, %s86
      %p100 = scmp.eq.s32.totalorder %s26, 1
      %p101 = por %p99, %p100
      %p103 = scmp.ne.s32.totalorder %s86, %s102
      %p104 = scmp.eq.s32.totalorder %s26, 0
      %p105 = por %p103, %p104
      %s106 = ssub.s32 %s20, %s27
      %p107 = scmp.eq.s32.totalorder %s106, 0
      %s109 = sadd.s32 %s108, 1
      %s110 = scalar_select %p107, %s108, %s109
      %p113 = pneg %p107
      %p114 = scmp.eq.s32.totalorder %s20, 1
      %p115 = por %p113, %p114
      %p116 = scmp.ne.s32.totalorder %s108, %s111
      %p117 = scmp.eq.s32.totalorder %s20, 0
      %p118 = por %p116, %p117
      %p119 = scmp.ne.s32.totalorder %s108, %s111
      %p120 = scmp.eq.s32.totalorder %s25, 1
      %p121 = por %p119, %p120
      %p122 = scmp.ne.s32.totalorder %s111, %s112
      %p123 = scmp.eq.s32.totalorder %s25, 0
      %p124 = por %p122, %p123
      %p125 = scmp.ne.s32.totalorder %s111, %s112
      %p126 = scmp.eq.s32.totalorder %s26, 1
      %p127 = por %p125, %p126
      %p129 = scmp.ne.s32.totalorder %s112, %s128
      %p130 = scmp.eq.s32.totalorder %s26, 0
      %p131 = por %p129, %p130
      %s133 = sadd.s32 %s132, 1
      %p136 = scmp.eq.s32.totalorder %s20, 1
      %p137 = scmp.ne.s32.totalorder %s132, %s134
      %p138 = scmp.eq.s32.totalorder %s20, 0
      %p139 = por %p137, %p138
      %p140 = scmp.ne.s32.totalorder %s132, %s134
      %p141 = scmp.eq.s32.totalorder %s25, 1
      %p142 = por %p140, %p141
      %p143 = scmp.ne.s32.totalorder %s134, %s135
      %p144 = scmp.eq.s32.totalorder %s25, 0
      %p145 = por %p143, %p144
      %p146 = scmp.ne.s32.totalorder %s134, %s135
      %p147 = scmp.eq.s32.totalorder %s26, 1
      %p148 = por %p146, %p147
      %p150 = scmp.ne.s32.totalorder %s135, %s149
      %p151 = scmp.eq.s32.totalorder %s26, 0
      %p152 = por %p150, %p151
      %s154 = sadd.s32 %s153, 1
      %p157 = scmp.eq.s32.totalorder %s20, 1
      %p158 = scmp.ne.s32.totalorder %s153, %s155
      %p159 = scmp.eq.s32.totalorder %s20, 0
      %p160 = por %p158, %p159
      %p161 = scmp.ne.s32.totalorder %s153, %s155
      %p162 = scmp.eq.s32.totalorder %s25, 1
      %p163 = por %p161, %p162
      %p164 = scmp.ne.s32.totalorder %s155, %s156
      %p165 = scmp.eq.s32.totalorder %s25, 0
      %p166 = por %p164, %p165
      %p167 = scmp.ne.s32.totalorder %s155, %s156
      %p168 = scmp.eq.s32.totalorder %s26, 1
      %p169 = por %p167, %p168
      %p171 = scmp.ne.s32.totalorder %s156, %s170
      %p172 = scmp.eq.s32.totalorder %s26, 0
      %p173 = por %p171, %p172
      %s175 = sadd.s32 %s174, 1
      %p178 = scmp.eq.s32.totalorder %s20, 1
      %p179 = scmp.ne.s32.totalorder %s174, %s176
      %p180 = scmp.eq.s32.totalorder %s20, 0
      %p181 = por %p179, %p180
      %p182 = scmp.ne.s32.totalorder %s174, %s176
      %p183 = scmp.eq.s32.totalorder %s25, 1
      %p184 = por %p182, %p183
      %p185 = scmp.ne.s32.totalorder %s176, %s177
      %p186 = scmp.eq.s32.totalorder %s25, 0
      %p187 = por %p185, %p186
      %p188 = scmp.ne.s32.totalorder %s176, %s177
      %p189 = scmp.eq.s32.totalorder %s26, 1
      %p190 = por %p188, %p189
      %p192 = scmp.ne.s32.totalorder %s177, %s191
      %p193 = scmp.eq.s32.totalorder %s26, 0
      %p194 = por %p192, %p193
      %s195 = ssub.s32 %s20, %s27
      %p196 = scmp.eq.s32.totalorder %s195, 0
      %s198 = sadd.s32 %s197, 1
      %s199 = scalar_select %p196, %s197, %s198
      %p202 = pneg %p196
      %p203 = scmp.eq.s32.totalorder %s20, 1
      %p204 = por %p202, %p203
      %p205 = scmp.ne.s32.totalorder %s197, %s200
      %p206 = scmp.eq.s32.totalorder %s20, 0
      %p207 = por %p205, %p206
      %p208 = scmp.ne.s32.totalorder %s197, %s200
      %p209 = scmp.eq.s32.totalorder %s25, 1
      %p210 = por %p208, %p209
      %p211 = scmp.ne.s32.totalorder %s200, %s201
      %p212 = scmp.eq.s32.totalorder %s25, 0
      %p213 = por %p211, %p212
      %p214 = scmp.ne.s32.totalorder %s200, %s201
      %p215 = scmp.eq.s32.totalorder %s26, 1
      %p216 = por %p214, %p215
      %p218 = scmp.ne.s32.totalorder %s201, %s217
      %p219 = scmp.eq.s32.totalorder %s26, 0
      %p220 = por %p218, %p219
      %p221 = scmp.le.s32.totalorder 1, %s20
      %p222 = scmp.lt.s32.totalorder %s20, 3
      %p223 = pnand %p221, %p222
      %p224 = pneg %p223
      // Predicated region
      $region9: #{decode_layer.1} parent=5 // pred_check
        _
      $region10: #{decode_layer.1} parent=5 // pred_check_branch
        %226 = sbr.rel (%p223) target = $region12
      $region11: #{decode_layer.1} parent=5 // pred_region
        %s227 = ssub.s32 %s20, 1
        // Predicated region
        $region13: #{decode_layer.1} parent=11 // pred_check
          %p228 = pneg %p145
        $region14: #{decode_layer.1} parent=11 // pred_check_branch
          %230 = sbr.rel (%p228) target = $region16
        $region15: #{decode_layer.1} parent=11 // pred_region
          _
        $region16: #{decode_layer.1} parent=11 // pred_fallthru
          _
        // Predicated region
        $region17: #{decode_layer.1} parent=11 // pred_check
          %p231 = pneg %p166
        $region18: #{decode_layer.1} parent=11 // pred_check_branch
          %233 = sbr.rel (%p231) target = $region20
        $region19: #{decode_layer.1} parent=11 // pred_region
          _
        $region20: #{decode_layer.1} parent=11 // pred_fallthru
          _
        // Predicated region
        $region21: #{decode_layer.1} parent=11 // pred_check
          %p234 = pneg %p187
        $region22: #{decode_layer.1} parent=11 // pred_check_branch
          %236 = sbr.rel (%p234) target = $region24
        $region23: #{decode_layer.1} parent=11 // pred_region
          %238 = vsyncadd [#allocation6], 0
          %s239 = sshll.u32 %s6, 4
          %s240 = int_to_ptr.hbm [resolvable:$true] %s239
          %s241 = sshll.u32 [#allocation5], 4
          %s242 = int_to_ptr.vmem [resolvable:$true] %s241
          %247 = dma.hbm_to_vmem [thread:$0]  %s240, 256, %s242, [#allocation6], 128, 128, 8
        $region24: #{decode_layer.1} parent=11 // pred_fallthru
          _
      $region12: #{decode_layer.1} parent=5 // pred_fallthru
        _
      %p248 = scmp.lt.s32.totalorder %s20, 2
      // Predicated region
      $region25: #{decode_layer.1} parent=5 // pred_check
        %p249 = pneg %p248
      $region26: #{decode_layer.1} parent=5 // pred_check_branch
        %251 = sbr.rel (%p249) target = $region28
      $region27: #{decode_layer.1} parent=5 // pred_region
        // Predicated region
        $region29: #{decode_layer.1} parent=27 // pred_check
          %p252 = pneg %p40
        $region30: #{decode_layer.1} parent=27 // pred_check_branch
          %254 = sbr.rel (%p252) target = $region32
        $region31: #{decode_layer.1} parent=27 // pred_region
          %p255 = scmp.lt.s32.totalorder %s20, 1
          %s256 = scalar_select %p255, %s20, 1
          %s257 = smul.addr %s256, 4
          %s258 = scalar_lea.vmem %s0, %s257
        $region32: #{decode_layer.1} parent=27 // pred_fallthru
          _
        // Predicated region
        $region33: #{decode_layer.1} parent=27 // pred_check
          %p259 = pneg %p66
        $region34: #{decode_layer.1} parent=27 // pred_check_branch
          %261 = sbr.rel (%p259) target = $region36
        $region35: #{decode_layer.1} parent=27 // pred_region
          %p262 = scmp.lt.s32.totalorder %s20, 1
          %s263 = scalar_select %p262, %s20, 1
          %s264 = smul.addr %s263, 4
          %s265 = scalar_lea.vmem %s1, %s264
        $region36: #{decode_layer.1} parent=27 // pred_fallthru
          _
        // Predicated region
        $region37: #{decode_layer.1} parent=27 // pred_check
          %p266 = pneg %p92
        $region38: #{decode_layer.1} parent=27 // pred_check_branch
          %268 = sbr.rel (%p266) target = $region40
        $region39: #{decode_layer.1} parent=27 // pred_region
          %p269 = scmp.lt.s32.totalorder %s20, 1
          %s270 = scalar_select %p269, %s20, 1
          %s271 = smul.addr %s270, 8
          %s272 = scalar_lea.vmem %s2, %s271
        $region40: #{decode_layer.1} parent=27 // pred_fallthru
          _
        // Predicated region
        $region41: #{decode_layer.1} parent=27 // pred_check
          %p273 = pneg %p118
        $region42: #{decode_layer.1} parent=27 // pred_check_branch
          %275 = sbr.rel (%p273) target = $region44
        $region43: #{decode_layer.1} parent=27 // pred_region
          %s276 = sand.u32 %s108, 1
          %s277 = scalar_lea.sflag [#allocation3], %s276
          %s278 = sand.u32 %s108, 1
          %s279 = smul.addr %s278, 8
          %s280 = scalar_lea.vmem [#allocation2], %s279
          %282 = vsyncadd %s277, 0
          %s283 = smul.addr %s20, 8
          %s284 = scalar_lea.hbm %s3, %s283
          %s286 = sshll.u32 %s284, 4
          %s287 = int_to_ptr.hbm [resolvable:$true] %s286
          %s288 = sshll.u32 %s280, 4
          %s289 = int_to_ptr.vmem [resolvable:$true] %s288
          %291 = dma.hbm_to_vmem [thread:$0]  %s287, 128, %s289, %s277
        $region44: #{decode_layer.1} parent=27 // pred_fallthru
          _
      $region28: #{decode_layer.1} parent=5 // pred_fallthru
        _
      %p292 = scmp.le.s32.totalorder 1, %s20
      %p293 = scmp.lt.s32.totalorder %s20, 3
      %p294 = pnand %p292, %p293
      %p295 = pneg %p294
      // Predicated region
      $region45: #{decode_layer.1} parent=5 // pred_check
        _
      $region46: #{decode_layer.1} parent=5 // pred_check_branch
        %297 = sbr.rel (%p294) target = $region48
      $region47: #{decode_layer.1} parent=5 // pred_region
        %s298 = ssub.s32 %s20, 1
        %s299 = sand.u32 %s111, 1
        %s300 = scalar_lea.sflag [#allocation3], %s299
        %s301 = sand.u32 %s111, 1
        %s302 = smul.addr %s301, 8
        %s303 = scalar_lea.vmem [#allocation2], %s302
        // Predicated region
        $region49: #{decode_layer.1} parent=47 // pred_check
          %p304 = pneg %p124
        $region50: #{decode_layer.1} parent=47 // pred_check_branch
          %306 = sbr.rel (%p304) target = $region52
        $region51: #{decode_layer.1} parent=47 // pred_region
          %308 = dma.done %s300, 128
        $region52: #{decode_layer.1} parent=47 // pred_fallthru
          _
        // Predicated region
        $region53: #{decode_layer.1} parent=47 // pred_check
          %p309 = pneg %p187
        $region54: #{decode_layer.1} parent=47 // pred_check_branch
          %311 = sbr.rel (%p309) target = $region56
        $region55: #{decode_layer.1} parent=47 // pred_region
          %313 = dma.done [#allocation6], 256
        $region56: #{decode_layer.1} parent=47 // pred_fallthru
          _
        %p314 = scmp.lt.s32.totalorder %s25, 1
        %s315 = scalar_select %p314, %s25, 1
        %s316 = smul.addr %s315, 4
        %s317 = scalar_lea.vmem %s0, %s316
        %p318 = pneg %p46
        %p319 = pneg %p43
        %p320 = scmp.lt.s32.totalorder %s25, 1
        %s321 = scalar_select %p320, %s25, 1
        %s322 = smul.addr %s321, 4
        %s323 = scalar_lea.vmem %s1, %s322
        %p324 = pneg %p72
        %p325 = pneg %p69
        %p326 = scmp.lt.s32.totalorder %s25, 1
        %s327 = scalar_select %p326, %s25, 1
        %s328 = smul.addr %s327, 8
        %s329 = scalar_lea.vmem %s2, %s328
        %p330 = pneg %p98
        %p331 = pneg %p95
        %s332 = sand.u32 %s111, 1
        %s333 = scalar_lea.sflag [#allocation3], %s332
        %s334 = sand.u32 %s111, 1
        %s335 = smul.addr %s334, 8
        %s336 = scalar_lea.vmem [#allocation2], %s335
        %p337 = pneg %p124
        %p338 = pneg %p121
        %p339 = pneg %p145
        %p340 = pneg %p142
        %p341 = pneg %p166
        %p342 = pneg %p163
        %p343 = pneg %p187
        %p344 = pneg %p184
        %p345 = pneg %p213
        %p346 = pneg %p210
        %s347 = sand.u32 %s200, 1
        %s348 = scalar_lea.sflag [#allocation4], %s347
        %s349 = sand.u32 %s200, 1
        %s350 = smul.addr %s349, 8
        %s351 = scalar_lea.vmem [#allocation7], %s350
        %p352 = scmp.lt.s32.totalorder %s25, 1
        %s353 = scalar_select %p352, %s25, 1
        %s354 = smul.addr %s353, 4
        %s355 = scalar_lea.vmem %s0, %s354
        %p356 = scmp.lt.s32.totalorder %s25, 1
        %s357 = scalar_select %p356, %s25, 1
        %s358 = smul.addr %s357, 4
        %s359 = scalar_lea.vmem %s1, %s358
        %p360 = scmp.lt.s32.totalorder %s25, 1
        %s361 = scalar_select %p360, %s25, 1
        %s362 = smul.addr %s361, 8
        %s363 = scalar_lea.vmem %s2, %s362
        %v365 = vld [vmem:[%s355] sm:$0xf]
        %v366 = vunpack.c.l.bf16 %v365
        %v367 = vld [vmem:[%s359] sm:$0xf]
        %v368 = vld [vmem:[%s4] sm:$0xff]
        %v369 = vld [vmem:[%s4 + $0x8] sm:$0xf]
        %v370 = vld [vmem:[%s4 + $0xc] sm:$0xff]
        %v371 = vld [vmem:[%s4 + $0x14] sm:$0xf]
        %v372 = vld [vmem:[%s4 + $0x18] sm:$0xff]
        %v373 = vld [vmem:[%s4 + $0x20] sm:$0xf]
        %v374 = vld [vmem:[%s4 + $0x24] sm:$0xff]
        %v375 = vld [vmem:[%s4 + $0x2c] sm:$0xf]
        %v376 = vld [vmem:[%s5] sm:$0xf]
        %v377 = vld [vmem:[%s5 + $0x4] sm:$0xf]
        %v378 = vld [vmem:[%s5 + $0x8] sm:$0xf]
        %v379 = vld [vmem:[%s5 + $0xc] sm:$0xf]
        %v380 = vld [vmem:[%s5 + $0x10] sm:$0xf]
        %v381 = vld [vmem:[%s5 + $0x14] sm:$0xf]
        %v382 = vld [vmem:[%s5 + $0x18] sm:$0xf]
        %v383 = vld [vmem:[%s5 + $0x1c] sm:$0xf]
        %v384 = vld [vmem:[#allocation5] sm:$0xff]
        %v385 = vld [vmem:[#allocation5 + $0x8] sm:$0xff]
        %v386 = vld [vmem:[%s363] sm:$0xff]
        %v387 = vsub.f32 %v386, 1.0
        %v388 = vmul.f32 %v387, 1e+09
        %v389 = vld [vmem:[%s303] sm:$0xff]
        %v390 = vsub.f32 %v389, 1.0
        %v391 = vmul.f32 %v390, 1e+09
        %vm392 = vcmask 261120
        %v393 = vsel %vm392, %v366, 0.0
        %394 = vadd.xlane.f32.xlu0 %v393
        %v395 = vpop.xlane.xlu0 %394
        %v396 = vrcp.pop 32.0
        %v397 = vmul.f32 32.0, %v396
        %v398 = vsub.f32 1.0, %v397
        %v399 = vmul.f32 %v396, %v398
        %v400 = vadd.f32 %v396, %v399
        %vm401 = vweird.f32 %v396
        %v402 = vsel %vm401, %v396, %v400
        %v403 = vmul.f32 %v395, %v402
        %v404 = vsub.f32 %v366, %v403
        %v405 = vmul.f32 %v404, %v404
        %v406 = vsel %vm392, %v405, 0.0
        %407 = vadd.xlane.f32.xlu0 %v406
        %v408 = vpop.xlane.xlu0 %407
        %v409 = vrcp.pop 31.0
        %v410 = vmul.f32 31.0, %v409
        %v411 = vsub.f32 1.0, %v410
        %v412 = vmul.f32 %v409, %v411
        %v413 = vadd.f32 %v409, %v412
        %vm414 = vweird.f32 %v409
        %v415 = vsel %vm414, %v409, %v413
        %v416 = vmul.f32 %v408, %v415
        %v417 = vperm.slane %v385, 2
        %v418 = vmul.f32 %v417, %v404
        %v419 = vrsqrt.pop %v416
        %v420 = vmul.f32 %v419, %v416
        %v421 = vmul.f32 %v420, %v419
        %v422 = vmul.f32 0.5, %v421
        %v423 = vsub.f32 1.5, %v422
        %v424 = vmul.f32 %v419, %v423
        %v425 = vmul.f32 %v416, %v424
        %vm426 = vcmp.eq.f32.partialorder %v416, inf
        %v427 = vsel %vm426, %v416, %v425
        %vm428 = vcmp.eq.f32.partialorder %v416, 0.0
        %v429 = vand.u32 %v416, 2147483648
        %v430 = vsel %vm428, %v429, %v427
        %v431 = vadd.f32 %v430, 1e-06
        %v432 = vrcp.pop %v431
        %v433 = vmul.f32 %v431, %v432
        %v434 = vsub.f32 1.0, %v433
        %v435 = vmul.f32 %v432, %v434
        %v436 = vadd.f32 %v432, %v435
        %vm437 = vweird.f32 %v431
        %vm438 = vweird.f32 %v432
        %vm439 = vmor %vm437, %vm438
        %v440 = vsel %vm439, %v432, %v436
        %v441 = vand.u32 2147483647, %v431
        %vm442 = vcmp.eq.f32.partialorder %v441, 8.507059e+37
        %v443 = vand.u32 %v431, 2147483648
        %v444 = vor.u32 1.1754944e-38, %v443
        %v445 = vsel %vm442, %v444, %v440
        %v446 = vmul.f32 %v418, %v445
        %v447 = vperm.slane %v385, 3
        %v448 = vadd.f32 %v446, %v447
        %v449 = vpack.c.bf16 %v448, %v448
        %v454 = vunpack.c.l.b16 %v368
        %v455 = vunpack.c.l.b16 %v370
        %v456 = vunpack.c.l.b16 %v372
        %v457 = vunpack.c.l.b16 %v374
        %v458 = vpack.c.b16 %v455, %v454
        %v459 = vpack.c.b16 %v457, %v456
        %v463 = vsel %vm392, %v449, 0
        %465 = vmatpush.bf16.msra.mxu0 0
        %466 = vmatpush.bf16.msra.mxu0 0
        %467 = vmatpush.bf16.msra.mxu0 0
        %468 = vmatpush.bf16.msra.mxu0 0
        %469 = vmatpush.bf16.msra.mxu0 0
        %470 = vmatpush.bf16.msra.mxu0 0
        %471 = vmatpush.bf16.msra.mxu0 %v459
        %472 = vmatpush.bf16.msra.mxu0 %v458
        %473 = vmatmul.bf16.gmra.mxu0 %v463
        %v474 = vpop.f32.mrf.mxu0
        %v475 = vadd.f32 0.0, %v474
        %v476 = vpop.f32.mrf.mxu0
        %477 = vdwg.mxu0
        %v478 = vperm.slane %v384, 0
        %v479 = vadd.f32 %v475, %v478
        %v480 = vperm.slane %v384, 1
        %482 = vrot.lane.b32.xlu0 %v480, 32
        %v483 = vpop.permute.xlu0 %482
        %v485 = vadd.f32 %v475, %v483
        %v486 = vperm.slane %v384, 2
        %488 = vrot.lane.b32.xlu0 %v486, 64
        %v489 = vpop.permute.xlu0 %488
        %v491 = vadd.f32 %v475, %v489
        %493 = vrot.lane.b32.xlu0 %v485, 96
        %v494 = vpop.permute.xlu0 %493
        %vm495 = vcmask 64512
        %v497 = vsel %vm495, %v479, 0
        %v499 = vsel %vm495, %v494, 0
        %501 = vmatpush.xpose.msra.mxu0 0.0
        %502 = vmatpush.xpose.msra.mxu0 0.0
        %503 = vmatpush.xpose.msra.mxu0 0.0
        %504 = vmatpush.xpose.msra.mxu0 0.0
        %505 = vmatpush.xpose.msra.mxu0 0.0
        %506 = vmatpush.xpose.msra.mxu0 0.0
        %507 = vmatpush.xpose.msra.mxu0 0.0
        %508 = vmatpush.xpose.msra.mxu0 0.0
        %509 = vmatpush.xpose.msra.mxu0 0.0
        %510 = vmatpush.xpose.msra.mxu0 0.0
        %511 = vmatpush.xpose.msra.mxu0 0.0
        %512 = vmatpush.xpose.msra.mxu0 0.0
        %513 = vmatpush.xpose.msra.mxu0 0.0
        %514 = vmatpush.xpose.msra.mxu0 0.0
        %515 = vmatpush.xpose.msra.mxu0 0.0
        %516 = vmatpush.xpose.msra.mxu0 %v499
        %517 = vmatmul.f32.gmra.mxu0 %v497
        %v518 = vpop.f32.mrf.mxu0
        %v519 = vadd.f32 %v388, %v518
        %520 = vdwg.mxu0
        %v521 = vsel %vm495, %v519, -inf
        %522 = vmax.xlane.f32.xlu0 %v521
        %v523 = vpop.xlane.xlu0 %522
        %v524 = vsub.f32 %v519, %v523
        %v525 = vmul.f32 %v524, 1.442695
        %v526 = vpow.pop %v525
        %v527 = vsel %vm495, %v526, 0.0
        %528 = vadd.xlane.f32.xlu0 %v527
        %v529 = vpop.xlane.xlu0 %528
        %531 = vrot.lane.b32.xlu0 %v491, 64
        %v532 = vpop.permute.xlu0 %531
        %v535 = vsel %vm495, %v526, 0
        %537 = vmatpush.msra.mxu0 0.0
        %538 = vmatpush.msra.mxu0 0.0
        %539 = vmatpush.msra.mxu0 0.0
        %540 = vmatpush.msra.mxu0 0.0
        %541 = vmatpush.msra.mxu0 0.0
        %542 = vmatpush.msra.mxu0 0.0
        %543 = vmatpush.msra.mxu0 0.0
        %544 = vmatpush.msra.mxu0 0.0
        %545 = vmatpush.msra.mxu0 0.0
        %546 = vmatpush.msra.mxu0 0.0
        %547 = vmatpush.msra.mxu0 0.0
        %548 = vmatpush.msra.mxu0 0.0
        %549 = vmatpush.msra.mxu0 0.0
        %550 = vmatpush.msra.mxu0 0.0
        %551 = vmatpush.msra.mxu0 0.0
        %552 = vmatpush.msra.mxu0 %v532
        %553 = vmatmul.f32.gmra.mxu0 %v535
        %v554 = vpop.f32.mrf.mxu0
        %v555 = vadd.f32 0.0, %v554
        %556 = vdwg.mxu0
        %v557 = vrcp.pop %v529
        %v558 = vmul.f32 %v555, %v557
        %559 = vrot.lane.b32.xlu0 %v479, 120
        %v560 = vpop.permute.xlu0 %559
        %561 = vrot.lane.b32.xlu0 %v485, 88
        %v562 = vpop.permute.xlu0 %561
        %v563 = vsel %vm495, %v560, 0
        %v565 = vsel %vm495, %v562, 0
        %567 = vmatpush.xpose.msra.mxu0 0.0
        %568 = vmatpush.xpose.msra.mxu0 0.0
        %569 = vmatpush.xpose.msra.mxu0 0.0
        %570 = vmatpush.xpose.msra.mxu0 0.0
        %571 = vmatpush.xpose.msra.mxu0 0.0
        %572 = vmatpush.xpose.msra.mxu0 0.0
        %573 = vmatpush.xpose.msra.mxu0 0.0
        %574 = vmatpush.xpose.msra.mxu0 0.0
        %575 = vmatpush.xpose.msra.mxu0 0.0
        %576 = vmatpush.xpose.msra.mxu0 0.0
        %577 = vmatpush.xpose.msra.mxu0 0.0
        %578 = vmatpush.xpose.msra.mxu0 0.0
        %579 = vmatpush.xpose.msra.mxu0 0.0
        %580 = vmatpush.xpose.msra.mxu0 0.0
        %581 = vmatpush.xpose.msra.mxu0 0.0
        %582 = vmatpush.xpose.msra.mxu0 %v565
        %583 = vmatmul.f32.gmra.mxu0 %v563
        %v584 = vpop.f32.mrf.mxu0
        %v585 = vadd.f32 %v388, %v584
        %586 = vdwg.mxu0
        %v587 = vsel %vm495, %v585, -inf
        %588 = vmax.xlane.f32.xlu0 %v587
        %v589 = vpop.xlane.xlu0 %588
        %v590 = vsub.f32 %v585, %v589
        %v591 = vmul.f32 %v590, 1.442695
        %v592 = vpow.pop %v591
        %v593 = vsel %vm495, %v592, 0.0
        %594 = vadd.xlane.f32.xlu0 %v593
        %v595 = vpop.xlane.xlu0 %594
        %596 = vrot.lane.b32.xlu0 %v491, 56
        %v597 = vpop.permute.xlu0 %596
        %v600 = vsel %vm495, %v592, 0
        %602 = vmatpush.msra.mxu0 0.0
        %603 = vmatpush.msra.mxu0 0.0
        %604 = vmatpush.msra.mxu0 0.0
        %605 = vmatpush.msra.mxu0 0.0
        %606 = vmatpush.msra.mxu0 0.0
        %607 = vmatpush.msra.mxu0 0.0
        %608 = vmatpush.msra.mxu0 0.0
        %609 = vmatpush.msra.mxu0 0.0
        %610 = vmatpush.msra.mxu0 0.0
        %611 = vmatpush.msra.mxu0 0.0
        %612 = vmatpush.msra.mxu0 0.0
        %613 = vmatpush.msra.mxu0 0.0
        %614 = vmatpush.msra.mxu0 0.0
        %615 = vmatpush.msra.mxu0 0.0
        %616 = vmatpush.msra.mxu0 0.0
        %617 = vmatpush.msra.mxu0 %v597
        %618 = vmatmul.f32.gmra.mxu0 %v600
        %v619 = vpop.f32.mrf.mxu0
        %v620 = vadd.f32 0.0, %v619
        %621 = vdwg.mxu0
        %v622 = vrcp.pop %v595
        %v623 = vmul.f32 %v620, %v622
        %624 = vrot.lane.b32.xlu0 %v479, 112
        %v625 = vpop.permute.xlu0 %624
        %626 = vrot.lane.b32.xlu0 %v485, 80
        %v627 = vpop.permute.xlu0 %626
        %v628 = vsel %vm495, %v625, 0
        %v630 = vsel %vm495, %v627, 0
        %632 = vmatpush.xpose.msra.mxu0 0.0
        %633 = vmatpush.xpose.msra.mxu0 0.0
        %634 = vmatpush.xpose.msra.mxu0 0.0
        %635 = vmatpush.xpose.msra.mxu0 0.0
        %636 = vmatpush.xpose.msra.mxu0 0.0
        %637 = vmatpush.xpose.msra.mxu0 0.0
        %638 = vmatpush.xpose.msra.mxu0 0.0
        %639 = vmatpush.xpose.msra.mxu0 0.0
        %640 = vmatpush.xpose.msra.mxu0 0.0
        %641 = vmatpush.xpose.msra.mxu0 0.0
        %642 = vmatpush.xpose.msra.mxu0 0.0
        %643 = vmatpush.xpose.msra.mxu0 0.0
        %644 = vmatpush.xpose.msra.mxu0 0.0
        %645 = vmatpush.xpose.msra.mxu0 0.0
        %646 = vmatpush.xpose.msra.mxu0 0.0
        %647 = vmatpush.xpose.msra.mxu0 %v630
        %648 = vmatmul.f32.gmra.mxu0 %v628
        %v649 = vpop.f32.mrf.mxu0
        %v650 = vadd.f32 %v388, %v649
        %651 = vdwg.mxu0
        %v652 = vsel %vm495, %v650, -inf
        %653 = vmax.xlane.f32.xlu0 %v652
        %v654 = vpop.xlane.xlu0 %653
        %v655 = vsub.f32 %v650, %v654
        %v656 = vmul.f32 %v655, 1.442695
        %v657 = vpow.pop %v656
        %v658 = vsel %vm495, %v657, 0.0
        %659 = vadd.xlane.f32.xlu0 %v658
        %v660 = vpop.xlane.xlu0 %659
        %661 = vrot.lane.b32.xlu0 %v491, 48
        %v662 = vpop.permute.xlu0 %661
        %v665 = vsel %vm495, %v657, 0
        %667 = vmatpush.msra.mxu0 0.0
        %668 = vmatpush.msra.mxu0 0.0
        %669 = vmatpush.msra.mxu0 0.0
        %670 = vmatpush.msra.mxu0 0.0
        %671 = vmatpush.msra.mxu0 0.0
        %672 = vmatpush.msra.mxu0 0.0
        %673 = vmatpush.msra.mxu0 0.0
        %674 = vmatpush.msra.mxu0 0.0
        %675 = vmatpush.msra.mxu0 0.0
        %676 = vmatpush.msra.mxu0 0.0
        %677 = vmatpush.msra.mxu0 0.0
        %678 = vmatpush.msra.mxu0 0.0
        %679 = vmatpush.msra.mxu0 0.0
        %680 = vmatpush.msra.mxu0 0.0
        %681 = vmatpush.msra.mxu0 0.0
        %682 = vmatpush.msra.mxu0 %v662
        %683 = vmatmul.f32.gmra.mxu0 %v665
        %v684 = vpop.f32.mrf.mxu0
        %v685 = vadd.f32 0.0, %v684
        %686 = vdwg.mxu0
        %v687 = vrcp.pop %v660
        %v688 = vmul.f32 %v685, %v687
        %689 = vrot.lane.b32.xlu0 %v479, 104
        %v690 = vpop.permute.xlu0 %689
        %691 = vrot.lane.b32.xlu0 %v485, 72
        %v692 = vpop.permute.xlu0 %691
        %v693 = vsel %vm495, %v690, 0
        %v695 = vsel %vm495, %v692, 0
        %697 = vmatpush.xpose.msra.mxu0 0.0
        %698 = vmatpush.xpose.msra.mxu0 0.0
        %699 = vmatpush.xpose.msra.mxu0 0.0
        %700 = vmatpush.xpose.msra.mxu0 0.0
        %701 = vmatpush.xpose.msra.mxu0 0.0
        %702 = vmatpush.xpose.msra.mxu0 0.0
        %703 = vmatpush.xpose.msra.mxu0 0.0
        %704 = vmatpush.xpose.msra.mxu0 0.0
        %705 = vmatpush.xpose.msra.mxu0 0.0
        %706 = vmatpush.xpose.msra.mxu0 0.0
        %707 = vmatpush.xpose.msra.mxu0 0.0
        %708 = vmatpush.xpose.msra.mxu0 0.0
        %709 = vmatpush.xpose.msra.mxu0 0.0
        %710 = vmatpush.xpose.msra.mxu0 0.0
        %711 = vmatpush.xpose.msra.mxu0 0.0
        %712 = vmatpush.xpose.msra.mxu0 %v695
        %713 = vmatmul.f32.gmra.mxu0 %v693
        %v714 = vpop.f32.mrf.mxu0
        %v715 = vadd.f32 %v388, %v714
        %716 = vdwg.mxu0
        %v717 = vsel %vm495, %v715, -inf
        %718 = vmax.xlane.f32.xlu0 %v717
        %v719 = vpop.xlane.xlu0 %718
        %v720 = vsub.f32 %v715, %v719
        %v721 = vmul.f32 %v720, 1.442695
        %v722 = vpow.pop %v721
        %v723 = vsel %vm495, %v722, 0.0
        %724 = vadd.xlane.f32.xlu0 %v723
        %v725 = vpop.xlane.xlu0 %724
        %726 = vrot.lane.b32.xlu0 %v491, 40
        %v727 = vpop.permute.xlu0 %726
        %v730 = vsel %vm495, %v722, 0
        %732 = vmatpush.msra.mxu0 0.0
        %733 = vmatpush.msra.mxu0 0.0
        %734 = vmatpush.msra.mxu0 0.0
        %735 = vmatpush.msra.mxu0 0.0
        %736 = vmatpush.msra.mxu0 0.0
        %737 = vmatpush.msra.mxu0 0.0
        %738 = vmatpush.msra.mxu0 0.0
        %739 = vmatpush.msra.mxu0 0.0
        %740 = vmatpush.msra.mxu0 0.0
        %741 = vmatpush.msra.mxu0 0.0
        %742 = vmatpush.msra.mxu0 0.0
        %743 = vmatpush.msra.mxu0 0.0
        %744 = vmatpush.msra.mxu0 0.0
        %745 = vmatpush.msra.mxu0 0.0
        %746 = vmatpush.msra.mxu0 0.0
        %747 = vmatpush.msra.mxu0 %v727
        %748 = vmatmul.f32.gmra.mxu0 %v730
        %v749 = vpop.f32.mrf.mxu0
        %v750 = vadd.f32 0.0, %v749
        %751 = vdwg.mxu0
        %v752 = vrcp.pop %v725
        %v753 = vmul.f32 %v750, %v752
        %755 = vrot.lane.b32.xlu0 %v623, 8
        %v756 = vpop.permute.xlu0 %755
        %759 = vrot.lane.b32.xlu0 %v688, 16
        %v760 = vpop.permute.xlu0 %759
        %763 = vrot.lane.b32.xlu0 %v753, 24
        %v764 = vpop.permute.xlu0 %763
        %v766 = vsel %vm495, %v558, %v756
        %vm767 = vcmask 130048
        %v768 = vsel %vm767, %v766, %v760
        %vm769 = vcmask 195584
        %v770 = vsel %vm769, %v768, %v764
        %v771 = vpack.c.bf16 %v770, %v770
        %v772 = vperm.slane %v384, 3
        %773 = vrot.lane.b32.xlu0 %v458, 32
        %v774 = vpop.permute.xlu0 %773
        %775 = vrot.lane.b32.xlu0 %v459, 32
        %v776 = vpop.permute.xlu0 %775
        %v780 = vsel %vm392, %v771, 0
        %782 = vmatpush.bf16.msra.mxu0 0
        %783 = vmatpush.bf16.msra.mxu0 0
        %784 = vmatpush.bf16.msra.mxu0 0
        %785 = vmatpush.bf16.msra.mxu0 0
        %786 = vmatpush.bf16.msra.mxu0 0
        %787 = vmatpush.bf16.msra.mxu0 0
        %788 = vmatpush.bf16.msra.mxu0 %v776
        %789 = vmatpush.bf16.msra.mxu0 %v774
        %790 = vmatmul.bf16.gmra.mxu0 %v780
        %v791 = vpop.f32.mrf.mxu0
        %v792 = vadd.f32 %v772, %v791
        %v793 = vpop.f32.mrf.mxu0
        %794 = vdwg.mxu0
        %v795 = vadd.f32 %v366, %v792
        %v796 = vsel %vm392, %v795, 0.0
        %797 = vadd.xlane.f32.xlu0 %v796
        %v798 = vpop.xlane.xlu0 %797
        %v799 = vmul.f32 %v798, %v402
        %v800 = vsub.f32 %v795, %v799
        %v801 = vmul.f32 %v800, %v800
        %v802 = vsel %vm392, %v801, 0.0
        %803 = vadd.xlane.f32.xlu0 %v802
        %v804 = vpop.xlane.xlu0 %803
        %v805 = vmul.f32 %v804, %v415
        %v806 = vperm.slane %v385, 4
        %v807 = vmul.f32 %v806, %v800
        %v808 = vrsqrt.pop %v805
        %v809 = vmul.f32 %v808, %v805
        %v810 = vmul.f32 %v809, %v808
        %v811 = vmul.f32 0.5, %v810
        %v812 = vsub.f32 1.5, %v811
        %v813 = vmul.f32 %v808, %v812
        %v814 = vmul.f32 %v805, %v813
        %vm815 = vcmp.eq.f32.partialorder %v805, inf
        %v816 = vsel %vm815, %v805, %v814
        %vm817 = vcmp.eq.f32.partialorder %v805, 0.0
        %v818 = vand.u32 %v805, 2147483648
        %v819 = vsel %vm817, %v818, %v816
        %v820 = vadd.f32 %v819, 1e-06
        %v821 = vrcp.pop %v820
        %v822 = vmul.f32 %v820, %v821
        %v823 = vsub.f32 1.0, %v822
        %v824 = vmul.f32 %v821, %v823
        %v825 = vadd.f32 %v821, %v824
        %vm826 = vweird.f32 %v820
        %vm827 = vweird.f32 %v821
        %vm828 = vmor %vm826, %vm827
        %v829 = vsel %vm828, %v821, %v825
        %v830 = vand.u32 2147483647, %v820
        %vm831 = vcmp.eq.f32.partialorder %v830, 8.507059e+37
        %v832 = vand.u32 %v820, 2147483648
        %v833 = vor.u32 1.1754944e-38, %v832
        %v834 = vsel %vm831, %v833, %v829
        %v835 = vmul.f32 %v807, %v834
        %v836 = vperm.slane %v385, 5
        %v837 = vadd.f32 %v835, %v836
        %v838 = vpack.c.bf16 %v837, %v837
        %v839 = vperm.slane %v384, 4
        %v840 = vunpack.c.h.b16 %v368
        %v841 = vunpack.c.h.b16 %v370
        %v842 = vunpack.c.h.b16 %v372
        %v843 = vunpack.c.h.b16 %v374
        %v844 = vpack.c.b16 %v841, %v840
        %v845 = vpack.c.b16 %v843, %v842
        %v849 = vsel %vm392, %v838, 0
        %851 = vmatpush.bf16.msra.mxu0 0
        %852 = vmatpush.bf16.msra.mxu0 0
        %853 = vmatpush.bf16.msra.mxu0 0
        %854 = vmatpush.bf16.msra.mxu0 0
        %855 = vmatpush.bf16.msra.mxu0 0
        %856 = vmatpush.bf16.msra.mxu0 0
        %857 = vmatpush.bf16.msra.mxu0 %v845
        %858 = vmatpush.bf16.msra.mxu0 %v844
        %859 = vmatmul.bf16.gmra.mxu0 %v849
        %v860 = vpop.f32.mrf.mxu0
        %v861 = vadd.f32 %v839, %v860
        %v862 = vpop.f32.mrf.mxu0
        %863 = vdwg.mxu0
        %864 = vrot.lane.b32.xlu0 %v844, 96
        %v865 = vpop.permute.xlu0 %864
        %866 = vrot.lane.b32.xlu0 %v845, 96
        %v867 = vpop.permute.xlu0 %866
        %v871 = vsel %vm392, %v367, 0
        %873 = vmatpush.bf16.msra.mxu0 0
        %874 = vmatpush.bf16.msra.mxu0 0
        %875 = vmatpush.bf16.msra.mxu0 0
        %876 = vmatpush.bf16.msra.mxu0 0
        %877 = vmatpush.bf16.msra.mxu0 0
        %878 = vmatpush.bf16.msra.mxu0 0
        %879 = vmatpush.bf16.msra.mxu0 %v867
        %880 = vmatpush.bf16.msra.mxu0 %v865
        %881 = vmatmul.bf16.gmra.mxu0 %v871
        %v882 = vpop.f32.mrf.mxu0
        %v883 = vadd.f32 0.0, %v882
        %v884 = vpop.f32.mrf.mxu0
        %885 = vdwg.mxu0
        %v886 = vperm.slane %v384, 5
        %v887 = vadd.f32 %v883, %v886
        %v888 = vperm.slane %v384, 6
        %890 = vrot.lane.b32.xlu0 %v888, 32
        %v891 = vpop.permute.xlu0 %890
        %v893 = vadd.f32 %v883, %v891
        %v895 = vsel %vm495, %v861, 0
        %v898 = vsel %vm495, %v887, 0
        %900 = vmatpush.xpose.msra.mxu0 0.0
        %901 = vmatpush.xpose.msra.mxu0 0.0
        %902 = vmatpush.xpose.msra.mxu0 0.0
        %903 = vmatpush.xpose.msra.mxu0 0.0
        %904 = vmatpush.xpose.msra.mxu0 0.0
        %905 = vmatpush.xpose.msra.mxu0 0.0
        %906 = vmatpush.xpose.msra.mxu0 0.0
        %907 = vmatpush.xpose.msra.mxu0 0.0
        %908 = vmatpush.xpose.msra.mxu0 0.0
        %909 = vmatpush.xpose.msra.mxu0 0.0
        %910 = vmatpush.xpose.msra.mxu0 0.0
        %911 = vmatpush.xpose.msra.mxu0 0.0
        %912 = vmatpush.xpose.msra.mxu0 0.0
        %913 = vmatpush.xpose.msra.mxu0 0.0
        %914 = vmatpush.xpose.msra.mxu0 0.0
        %915 = vmatpush.xpose.msra.mxu0 %v898
        %916 = vmatmul.f32.gmra.mxu0 %v895
        %v917 = vpop.f32.mrf.mxu0
        %v918 = vadd.f32 %v391, %v917
        %919 = vdwg.mxu0
        %v920 = vsel %vm495, %v918, -inf
        %921 = vmax.xlane.f32.xlu0 %v920
        %v922 = vpop.xlane.xlu0 %921
        %v923 = vsub.f32 %v918, %v922
        %v924 = vmul.f32 %v923, 1.442695
        %v925 = vpow.pop %v924
        %v926 = vsel %vm495, %v925, 0.0
        %927 = vadd.xlane.f32.xlu0 %v926
        %v928 = vpop.xlane.xlu0 %927
        %930 = vrot.lane.b32.xlu0 %v893, 96
        %v931 = vpop.permute.xlu0 %930
        %v934 = vsel %vm495, %v925, 0
        %936 = vmatpush.msra.mxu0 0.0
        %937 = vmatpush.msra.mxu0 0.0
        %938 = vmatpush.msra.mxu0 0.0
        %939 = vmatpush.msra.mxu0 0.0
        %940 = vmatpush.msra.mxu0 0.0
        %941 = vmatpush.msra.mxu0 0.0
        %942 = vmatpush.msra.mxu0 0.0
        %943 = vmatpush.msra.mxu0 0.0
        %944 = vmatpush.msra.mxu0 0.0
        %945 = vmatpush.msra.mxu0 0.0
        %946 = vmatpush.msra.mxu0 0.0
        %947 = vmatpush.msra.mxu0 0.0
        %948 = vmatpush.msra.mxu0 0.0
        %949 = vmatpush.msra.mxu0 0.0
        %950 = vmatpush.msra.mxu0 0.0
        %951 = vmatpush.msra.mxu0 %v931
        %952 = vmatmul.f32.gmra.mxu0 %v934
        %v953 = vpop.f32.mrf.mxu0
        %v954 = vadd.f32 0.0, %v953
        %955 = vdwg.mxu0
        %v956 = vrcp.pop %v928
        %v957 = vmul.f32 %v954, %v956
        %958 = vrot.lane.b32.xlu0 %v861, 120
        %v959 = vpop.permute.xlu0 %958
        %960 = vrot.lane.b32.xlu0 %v887, 120
        %v961 = vpop.permute.xlu0 %960
        %v962 = vsel %vm495, %v959, 0
        %v964 = vsel %vm495, %v961, 0
        %966 = vmatpush.xpose.msra.mxu0 0.0
        %967 = vmatpush.xpose.msra.mxu0 0.0
        %968 = vmatpush.xpose.msra.mxu0 0.0
        %969 = vmatpush.xpose.msra.mxu0 0.0
        %970 = vmatpush.xpose.msra.mxu0 0.0
        %971 = vmatpush.xpose.msra.mxu0 0.0
        %972 = vmatpush.xpose.msra.mxu0 0.0
        %973 = vmatpush.xpose.msra.mxu0 0.0
        %974 = vmatpush.xpose.msra.mxu0 0.0
        %975 = vmatpush.xpose.msra.mxu0 0.0
        %976 = vmatpush.xpose.msra.mxu0 0.0
        %977 = vmatpush.xpose.msra.mxu0 0.0
        %978 = vmatpush.xpose.msra.mxu0 0.0
        %979 = vmatpush.xpose.msra.mxu0 0.0
        %980 = vmatpush.xpose.msra.mxu0 0.0
        %981 = vmatpush.xpose.msra.mxu0 %v964
        %982 = vmatmul.f32.gmra.mxu0 %v962
        %v983 = vpop.f32.mrf.mxu0
        %v984 = vadd.f32 %v391, %v983
        %985 = vdwg.mxu0
        %v986 = vsel %vm495, %v984, -inf
        %987 = vmax.xlane.f32.xlu0 %v986
        %v988 = vpop.xlane.xlu0 %987
        %v989 = vsub.f32 %v984, %v988
        %v990 = vmul.f32 %v989, 1.442695
        %v991 = vpow.pop %v990
        %v992 = vsel %vm495, %v991, 0.0
        %993 = vadd.xlane.f32.xlu0 %v992
        %v994 = vpop.xlane.xlu0 %993
        %995 = vrot.lane.b32.xlu0 %v893, 88
        %v996 = vpop.permute.xlu0 %995
        %v999 = vsel %vm495, %v991, 0
        %1001 = vmatpush.msra.mxu0 0.0
        %1002 = vmatpush.msra.mxu0 0.0
        %1003 = vmatpush.msra.mxu0 0.0
        %1004 = vmatpush.msra.mxu0 0.0
        %1005 = vmatpush.msra.mxu0 0.0
        %1006 = vmatpush.msra.mxu0 0.0
        %1007 = vmatpush.msra.mxu0 0.0
        %1008 = vmatpush.msra.mxu0 0.0
        %1009 = vmatpush.msra.mxu0 0.0
        %1010 = vmatpush.msra.mxu0 0.0
        %1011 = vmatpush.msra.mxu0 0.0
        %1012 = vmatpush.msra.mxu0 0.0
        %1013 = vmatpush.msra.mxu0 0.0
        %1014 = vmatpush.msra.mxu0 0.0
        %1015 = vmatpush.msra.mxu0 0.0
        %1016 = vmatpush.msra.mxu0 %v996
        %1017 = vmatmul.f32.gmra.mxu0 %v999
        %v1018 = vpop.f32.mrf.mxu0
        %v1019 = vadd.f32 0.0, %v1018
        %1020 = vdwg.mxu0
        %v1021 = vrcp.pop %v994
        %v1022 = vmul.f32 %v1019, %v1021
        %1023 = vrot.lane.b32.xlu0 %v861, 112
        %v1024 = vpop.permute.xlu0 %1023
        %1025 = vrot.lane.b32.xlu0 %v887, 112
        %v1026 = vpop.permute.xlu0 %1025
        %v1027 = vsel %vm495, %v1024, 0
        %v1029 = vsel %vm495, %v1026, 0
        %1031 = vmatpush.xpose.msra.mxu0 0.0
        %1032 = vmatpush.xpose.msra.mxu0 0.0
        %1033 = vmatpush.xpose.msra.mxu0 0.0
        %1034 = vmatpush.xpose.msra.mxu0 0.0
        %1035 = vmatpush.xpose.msra.mxu0 0.0
        %1036 = vmatpush.xpose.msra.mxu0 0.0
        %1037 = vmatpush.xpose.msra.mxu0 0.0
        %1038 = vmatpush.xpose.msra.mxu0 0.0
        %1039 = vmatpush.xpose.msra.mxu0 0.0
        %1040 = vmatpush.xpose.msra.mxu0 0.0
        %1041 = vmatpush.xpose.msra.mxu0 0.0
        %1042 = vmatpush.xpose.msra.mxu0 0.0
        %1043 = vmatpush.xpose.msra.mxu0 0.0
        %1044 = vmatpush.xpose.msra.mxu0 0.0
        %1045 = vmatpush.xpose.msra.mxu0 0.0
        %1046 = vmatpush.xpose.msra.mxu0 %v1029
        %1047 = vmatmul.f32.gmra.mxu0 %v1027
        %v1048 = vpop.f32.mrf.mxu0
        %v1049 = vadd.f32 %v391, %v1048
        %1050 = vdwg.mxu0
        %v1051 = vsel %vm495, %v1049, -inf
        %1052 = vmax.xlane.f32.xlu0 %v1051
        %v1053 = vpop.xlane.xlu0 %1052
        %v1054 = vsub.f32 %v1049, %v1053
        %v1055 = vmul.f32 %v1054, 1.442695
        %v1056 = vpow.pop %v1055
        %v1057 = vsel %vm495, %v1056, 0.0
        %1058 = vadd.xlane.f32.xlu0 %v1057
        %v1059 = vpop.xlane.xlu0 %1058
        %1060 = vrot.lane.b32.xlu0 %v893, 80
        %v1061 = vpop.permute.xlu0 %1060
        %v1064 = vsel %vm495, %v1056, 0
        %1066 = vmatpush.msra.mxu0 0.0
        %1067 = vmatpush.msra.mxu0 0.0
        %1068 = vmatpush.msra.mxu0 0.0
        %1069 = vmatpush.msra.mxu0 0.0
        %1070 = vmatpush.msra.mxu0 0.0
        %1071 = vmatpush.msra.mxu0 0.0
        %1072 = vmatpush.msra.mxu0 0.0
        %1073 = vmatpush.msra.mxu0 0.0
        %1074 = vmatpush.msra.mxu0 0.0
        %1075 = vmatpush.msra.mxu0 0.0
        %1076 = vmatpush.msra.mxu0 0.0
        %1077 = vmatpush.msra.mxu0 0.0
        %1078 = vmatpush.msra.mxu0 0.0
        %1079 = vmatpush.msra.mxu0 0.0
        %1080 = vmatpush.msra.mxu0 0.0
        %1081 = vmatpush.msra.mxu0 %v1061
        %1082 = vmatmul.f32.gmra.mxu0 %v1064
        %v1083 = vpop.f32.mrf.mxu0
        %v1084 = vadd.f32 0.0, %v1083
        %1085 = vdwg.mxu0
        %v1086 = vrcp.pop %v1059
        %v1087 = vmul.f32 %v1084, %v1086
        %1088 = vrot.lane.b32.xlu0 %v861, 104
        %v1089 = vpop.permute.xlu0 %1088
        %1090 = vrot.lane.b32.xlu0 %v887, 104
        %v1091 = vpop.permute.xlu0 %1090
        %v1092 = vsel %vm495, %v1089, 0
        %v1094 = vsel %vm495, %v1091, 0
        %1096 = vmatpush.xpose.msra.mxu0 0.0
        %1097 = vmatpush.xpose.msra.mxu0 0.0
        %1098 = vmatpush.xpose.msra.mxu0 0.0
        %1099 = vmatpush.xpose.msra.mxu0 0.0
        %1100 = vmatpush.xpose.msra.mxu0 0.0
        %1101 = vmatpush.xpose.msra.mxu0 0.0
        %1102 = vmatpush.xpose.msra.mxu0 0.0
        %1103 = vmatpush.xpose.msra.mxu0 0.0
        %1104 = vmatpush.xpose.msra.mxu0 0.0
        %1105 = vmatpush.xpose.msra.mxu0 0.0
        %1106 = vmatpush.xpose.msra.mxu0 0.0
        %1107 = vmatpush.xpose.msra.mxu0 0.0
        %1108 = vmatpush.xpose.msra.mxu0 0.0
        %1109 = vmatpush.xpose.msra.mxu0 0.0
        %1110 = vmatpush.xpose.msra.mxu0 0.0
        %1111 = vmatpush.xpose.msra.mxu0 %v1094
        %1112 = vmatmul.f32.gmra.mxu0 %v1092
        %v1113 = vpop.f32.mrf.mxu0
        %v1114 = vadd.f32 %v391, %v1113
        %1115 = vdwg.mxu0
        %v1116 = vsel %vm495, %v1114, -inf
        %1117 = vmax.xlane.f32.xlu0 %v1116
        %v1118 = vpop.xlane.xlu0 %1117
        %v1119 = vsub.f32 %v1114, %v1118
        %v1120 = vmul.f32 %v1119, 1.442695
        %v1121 = vpow.pop %v1120
        %v1122 = vsel %vm495, %v1121, 0.0
        %1123 = vadd.xlane.f32.xlu0 %v1122
        %v1124 = vpop.xlane.xlu0 %1123
        %1125 = vrot.lane.b32.xlu0 %v893, 72
        %v1126 = vpop.permute.xlu0 %1125
        %v1129 = vsel %vm495, %v1121, 0
        %1131 = vmatpush.msra.mxu0 0.0
        %1132 = vmatpush.msra.mxu0 0.0
        %1133 = vmatpush.msra.mxu0 0.0
        %1134 = vmatpush.msra.mxu0 0.0
        %1135 = vmatpush.msra.mxu0 0.0
        %1136 = vmatpush.msra.mxu0 0.0
        %1137 = vmatpush.msra.mxu0 0.0
        %1138 = vmatpush.msra.mxu0 0.0
        %1139 = vmatpush.msra.mxu0 0.0
        %1140 = vmatpush.msra.mxu0 0.0
        %1141 = vmatpush.msra.mxu0 0.0
        %1142 = vmatpush.msra.mxu0 0.0
        %1143 = vmatpush.msra.mxu0 0.0
        %1144 = vmatpush.msra.mxu0 0.0
        %1145 = vmatpush.msra.mxu0 0.0
        %1146 = vmatpush.msra.mxu0 %v1126
        %1147 = vmatmul.f32.gmra.mxu0 %v1129
        %v1148 = vpop.f32.mrf.mxu0
        %v1149 = vadd.f32 0.0, %v1148
        %1150 = vdwg.mxu0
        %v1151 = vrcp.pop %v1124
        %v1152 = vmul.f32 %v1149, %v1151
        %1154 = vrot.lane.b32.xlu0 %v1022, 8
        %v1155 = vpop.permute.xlu0 %1154
        %1158 = vrot.lane.b32.xlu0 %v1087, 16
        %v1159 = vpop.permute.xlu0 %1158
        %1162 = vrot.lane.b32.xlu0 %v1152, 24
        %v1163 = vpop.permute.xlu0 %1162
        %v1165 = vsel %vm495, %v957, %v1155
        %v1166 = vsel %vm767, %v1165, %v1159
        %v1167 = vsel %vm769, %v1166, %v1163
        %v1168 = vpack.c.bf16 %v1167, %v1167
        %v1169 = vperm.slane %v384, 7
        %1170 = vrot.lane.b32.xlu0 %v844, 32
        %v1171 = vpop.permute.xlu0 %1170
        %1172 = vrot.lane.b32.xlu0 %v845, 32
        %v1173 = vpop.permute.xlu0 %1172
        %v1177 = vsel %vm392, %v1168, 0
        %1179 = vmatpush.bf16.msra.mxu0 0
        %1180 = vmatpush.bf16.msra.mxu0 0
        %1181 = vmatpush.bf16.msra.mxu0 0
        %1182 = vmatpush.bf16.msra.mxu0 0
        %1183 = vmatpush.bf16.msra.mxu0 0
        %1184 = vmatpush.bf16.msra.mxu0 0
        %1185 = vmatpush.bf16.msra.mxu0 %v1173
        %1186 = vmatpush.bf16.msra.mxu0 %v1171
        %1187 = vmatmul.bf16.gmra.mxu0 %v1177
        %v1188 = vpop.f32.mrf.mxu0
        %v1189 = vadd.f32 %v1169, %v1188
        %v1190 = vpop.f32.mrf.mxu0
        %1191 = vdwg.mxu0
        %v1192 = vadd.f32 %v795, %v1189
        %v1193 = vsel %vm392, %v1192, 0.0
        %1194 = vadd.xlane.f32.xlu0 %v1193
        %v1195 = vpop.xlane.xlu0 %1194
        %v1196 = vmul.f32 %v1195, %v402
        %v1197 = vsub.f32 %v1192, %v1196
        %v1198 = vmul.f32 %v1197, %v1197
        %v1199 = vsel %vm392, %v1198, 0.0
        %1200 = vadd.xlane.f32.xlu0 %v1199
        %v1201 = vpop.xlane.xlu0 %1200
        %v1202 = vmul.f32 %v1201, %v415
        %v1203 = vperm.slane %v385, 6
        %v1204 = vmul.f32 %v1203, %v1197
        %v1205 = vrsqrt.pop %v1202
        %v1206 = vmul.f32 %v1205, %v1202
        %v1207 = vmul.f32 %v1206, %v1205
        %v1208 = vmul.f32 0.5, %v1207
        %v1209 = vsub.f32 1.5, %v1208
        %v1210 = vmul.f32 %v1205, %v1209
        %v1211 = vmul.f32 %v1202, %v1210
        %vm1212 = vcmp.eq.f32.partialorder %v1202, inf
        %v1213 = vsel %vm1212, %v1202, %v1211
        %vm1214 = vcmp.eq.f32.partialorder %v1202, 0.0
        %v1215 = vand.u32 %v1202, 2147483648
        %v1216 = vsel %vm1214, %v1215, %v1213
        %v1217 = vadd.f32 %v1216, 1e-06
        %v1218 = vrcp.pop %v1217
        %v1219 = vmul.f32 %v1217, %v1218
        %v1220 = vsub.f32 1.0, %v1219
        %v1221 = vmul.f32 %v1218, %v1220
        %v1222 = vadd.f32 %v1218, %v1221
        %vm1223 = vweird.f32 %v1217
        %vm1224 = vweird.f32 %v1218
        %vm1225 = vmor %vm1223, %vm1224
        %v1226 = vsel %vm1225, %v1218, %v1222
        %v1227 = vand.u32 2147483647, %v1217
        %vm1228 = vcmp.eq.f32.partialorder %v1227, 8.507059e+37
        %v1229 = vand.u32 %v1217, 2147483648
        %v1230 = vor.u32 1.1754944e-38, %v1229
        %v1231 = vsel %vm1228, %v1230, %v1226
        %v1232 = vmul.f32 %v1204, %v1231
        %v1233 = vperm.slane %v385, 7
        %v1234 = vadd.f32 %v1232, %v1233
        %v1235 = vpack.c.bf16 %v1234, %v1234
        %v1236 = vperm.slane %v385, 0
        %v1241 = vunpack.c.l.b16 %v369
        %v1242 = vunpack.c.l.b16 %v371
        %v1243 = vunpack.c.l.b16 %v373
        %v1244 = vunpack.c.l.b16 %v375
        %v1245 = vpack.c.b16 %v1242, %v1241
        %v1246 = vpack.c.b16 %v1244, %v1243
        %v1250 = vsel %vm392, %v1235, 0
        %1252 = vmatpush.bf16.msra.mxu0 0
        %1253 = vmatpush.bf16.msra.mxu0 0
        %1254 = vmatpush.bf16.msra.mxu0 0
        %1255 = vmatpush.bf16.msra.mxu0 0
        %1256 = vmatpush.bf16.msra.mxu0 0
        %1257 = vmatpush.bf16.msra.mxu0 0
        %1258 = vmatpush.bf16.msra.mxu0 %v1246
        %1259 = vmatpush.bf16.msra.mxu0 %v1245
        %1260 = vmatmul.bf16.gmra.mxu0 %v1250
        %v1261 = vpop.f32.mrf.mxu0
        %v1262 = vadd.f32 %v1236, %v1261
        %v1263 = vpop.f32.mrf.mxu0
        %1264 = vdwg.mxu0
        %v1265 = vmax.f32 %v1262, 0.0
        %v1266 = vpack.c.bf16 %v1265, %v1265
        %v1267 = vperm.slane %v385, 1
        %v1276 = vunpack.c.l.b16 %v376
        %v1277 = vunpack.c.l.b16 %v377
        %v1278 = vunpack.c.l.b16 %v378
        %v1279 = vunpack.c.l.b16 %v379
        %v1280 = vunpack.c.l.b16 %v380
        %v1281 = vunpack.c.l.b16 %v381
        %v1282 = vunpack.c.l.b16 %v382
        %v1283 = vunpack.c.l.b16 %v383
        %v1284 = vpack.c.b16 %v1277, %v1276
        %v1285 = vpack.c.b16 %v1279, %v1278
        %v1286 = vpack.c.b16 %v1281, %v1280
        %v1287 = vpack.c.b16 %v1283, %v1282
        %vm1292 = vcmask 523264
        %v1294 = vsel %vm1292, %v1266, 0
        %1296 = vmatpush.bf16.msra.mxu0 0
        %1297 = vmatpush.bf16.msra.mxu0 0
        %1298 = vmatpush.bf16.msra.mxu0 0
        %1299 = vmatpush.bf16.msra.mxu0 0
        %1300 = vmatpush.bf16.msra.mxu0 %v1287
        %1301 = vmatpush.bf16.msra.mxu0 %v1286
        %1302 = vmatpush.bf16.msra.mxu0 %v1285
        %1303 = vmatpush.bf16.msra.mxu0 %v1284
        %1304 = vmatmul.bf16.gmra.mxu0 %v1294
        %v1305 = vpop.f32.mrf.mxu0
        %v1306 = vadd.f32 %v1267, %v1305
        %v1307 = vpop.f32.mrf.mxu0
        %1308 = vdwg.mxu0
        %v1309 = vadd.f32 %v1192, %v1306
        %1310 = vst.msk [vmem:[%s351] sm:$0xff] %vm392, %v1309
        %s1311 = sand.u32 %s200, 1
        %s1312 = scalar_lea.sflag [#allocation4], %s1311
        %s1313 = sand.u32 %s200, 1
        %s1314 = smul.addr %s1313, 8
        %s1315 = scalar_lea.vmem [#allocation7], %s1314
        // Predicated region
        $region57: #{decode_layer.1} parent=47 // pred_check
          %p1316 = pneg %p210
        $region58: #{decode_layer.1} parent=47 // pred_check_branch
          %1318 = sbr.rel (%p1316) target = $region60
        $region59: #{decode_layer.1} parent=47 // pred_region
          %1320 = vsyncadd %s1312, 0
          %s1321 = smul.addr %s25, 8
          %s1322 = scalar_lea.hbm %s7, %s1321
          %s1324 = sshll.u32 %s1315, 4
          %s1325 = int_to_ptr.vmem [resolvable:$true] %s1324
          %s1326 = sshll.u32 %s1322, 4
          %s1327 = int_to_ptr.hbm [resolvable:$true] %s1326
          %1329 = dma.vmem_to_hbm [thread:$0]  %s1325, 128, %s1327, %s1312
        $region60: #{decode_layer.1} parent=47 // pred_fallthru
          _
      $region48: #{decode_layer.1} parent=5 // pred_fallthru
        _
      %p1330 = scmp.le.s32.totalorder 2, %s20
      // Predicated region
      $region61: #{decode_layer.1} parent=5 // pred_check
        %p1331 = pneg %p1330
      $region62: #{decode_layer.1} parent=5 // pred_check_branch
        %1333 = sbr.rel (%p1331) target = $region64
      $region63: #{decode_layer.1} parent=5 // pred_region
        %s1334 = ssub.s32 %s20, 2
        // Predicated region
        $region65: #{decode_layer.1} parent=63 // pred_check
          %p1335 = pneg %p216
        $region66: #{decode_layer.1} parent=63 // pred_check_branch
          %1337 = sbr.rel (%p1335) target = $region68
        $region67: #{decode_layer.1} parent=63 // pred_region
          %s1338 = sand.u32 %s201, 1
          %s1339 = scalar_lea.sflag [#allocation4], %s1338
          %s1340 = sand.u32 %s201, 1
          %s1341 = smul.addr %s1340, 8
          %s1342 = scalar_lea.vmem [#allocation7], %s1341
          %1344 = dma.done %s1339, 128
        $region68: #{decode_layer.1} parent=63 // pred_fallthru
          _
      $region64: #{decode_layer.1} parent=5 // pred_fallthru
        _
    $region6: #{decode_layer.1} parent=1 // loop_footer
      %s24 = sadd.s32 1, %s20
    $region7: #{decode_layer.1} parent=1 // loop_footer_branch
      %19 = sbr.rel target = $region3
    $region8: #{decode_layer.1} parent=1 // loop_exit
      _
    %1345 = vsyncpa [#allocation3], 1
    %s1346 = scalar_lea.sflag [#allocation3], 1
    %1347 = vsyncpa %s1346, 1
    %1348 = vsyncpa [#allocation6], 1
    %1349 = vsyncpa [#allocation4], 1
    %s1350 = scalar_lea.sflag [#allocation4], 1
    %1351 = vsyncpa %s1350, 1

</llo_original>
